<compile_context>
chip_gen: v6e
topology: v6e:2x2x1
jax: 0.10.0
libtpu: 0.0.40
codegen_flags: <defaults>
</compile_context>

<pallas_src>
import functools

import jax
import jax.numpy as jnp
import numpy as np
from jax.experimental import pallas as pl
from jax.experimental.pallas import tpu as pltpu


# ------------------------------- Pallas kernel ------------------------------ #

def _shift2d(s, dy, dx, H, W):
    """t[y, x] = s[y + dy, x + dx] if in bounds else 0 (static dy, dx in {-1,0,1})."""
    if dy == 1:
        s = jnp.concatenate([s[1:, :], jnp.zeros((1, W), s.dtype)], axis=0)
    elif dy == -1:
        s = jnp.concatenate([jnp.zeros((1, W), s.dtype), s[:-1, :]], axis=0)
    if dx == 1:
        s = jnp.concatenate([s[:, 1:], jnp.zeros((H, 1), s.dtype)], axis=1)
    elif dx == -1:
        s = jnp.concatenate([jnp.zeros((H, 1), s.dtype), s[:, :-1]], axis=1)
    return s


def _disp_head_kernel(x_ref, w_ref, b_ref, *rest, Nb, C, H, W, upsample):
    """Fused DispHead forward for one group of Nb images.

    x_ref  : (Nb, C, H, W)   NCHW input tile (VMEM, native dtype)
    w_ref  : (C*9,)          conv weights in SMEM, index = c*9 + kh*3 + kw
    b_ref  : (1,)            bias in SMEM
    if upsample:
        a_ref     : (Ho, H)          row interpolation matrix
        btblk_ref : (Nb*W, Nb*Wo)    block-diagonal column interp matrix (transposed)
        o_ref     : (1, Ho, Nb*Wo)   lane-dense output slab
    else:
        o_ref     : (1, H, Nb*W)
    """
    if upsample:
        a_ref, btblk_ref, o_ref = rest
    else:
        (o_ref,) = rest

    ys = []
    for i in range(Nb):
        # 1) 3x3 conv, factored: 9 UNSHIFTED channel-weighted sums.
        #    Pure VPU scalar-broadcast FMAs (weights are SMEM scalars); no
        #    per-channel lane/sublane realignment.
        S = [[jnp.zeros((H, W), jnp.float32) for _ in range(3)] for _ in range(3)]
        for c in range(C):
            plane = x_ref[i, c].astype(jnp.float32)          # (H, W)
            for kh in range(3):
                for kw in range(3):
                    S[kh][kw] = S[kh][kw] + w_ref[c * 9 + kh * 3 + kw] * plane

        # 2) Combine the 9 sums with static zero-padded shifts (only 9 shifts,
        #    independent of C) and add the bias.
        acc = jnp.full((H, W), b_ref[0], dtype=jnp.float32)
        for kh in range(3):
            for kw in range(3):
                acc = acc + _shift2d(S[kh][kw], kh - 1, kw - 1, H, W)

        # 3) Sigmoid: exp on the EUP + approximate reciprocal on the EUP.
        ys.append(pl.reciprocal(1.0 + jnp.exp(-acc), approx=True))

    # Lane-stack the Nb results: image i occupies lane columns [i*W, (i+1)*W).
    y_cat = jnp.concatenate(ys, axis=1) if Nb > 1 else ys[0]          # (H, Nb*W)

    if upsample:
        # 4) Bilinear upsample (align_corners=False) for the whole group as two
        #    MXU matmuls: (A @ Y) @ blockdiag(Bt).
        t = jnp.dot(a_ref[...], y_cat, preferred_element_type=jnp.float32)        # (Ho, Nb*W)
        o_ref[0] = jnp.dot(t, btblk_ref[...], preferred_element_type=jnp.float32)  # (Ho, Nb*Wo)
    else:
        o_ref[0] = y_cat


# ------------------------------- host wrappers ------------------------------ #

def _interp_matrix(out_size, in_size, scale):
    """PyTorch-style bilinear (align_corners=False) 1-D interpolation matrix (numpy)."""
    i = np.arange(out_size, dtype=np.float64)
    src = (i + 0.5) / scale - 0.5
    src = np.maximum(src, 0.0)
    x0 = np.minimum(np.floor(src).astype(np.int64), in_size - 1)
    x1 = np.minimum(x0 + 1, in_size - 1)
    w1 = src - x0
    w0 = 1.0 - w1
    M = np.zeros((out_size, in_size), dtype=np.float32)
    M[np.arange(out_size), x0] += w0.astype(np.float32)
    M[np.arange(out_size), x1] += w1.astype(np.float32)
    return M


def _padded_bytes(rows, cols, itemsize):
    """VMEM footprint of a (rows, cols) tile after (8,128) lane/sublane padding."""
    return (-(-rows // 8) * 8) * (-(-cols // 128) * 128) * itemsize


def disp_head_forward(x_nchw, scale, weight, bias, *, lane_target=128,
                      max_images_per_step=8):
    """Equivalent of DispHead.forward(x, scale). Returns NCHW with 1 channel."""
    N, C, H, W = x_nchw.shape
    w_flat = weight.reshape(-1).astype(jnp.float32)    # (C*9,), index = c*9 + kh*3 + kw
    b = bias.reshape(-1).astype(jnp.float32)           # (1,)

    do_up = scale > 1
    if do_up:
        s = float(scale)
        Ho, Wo = int(H * s), int(W * s)
    else:
        Ho, Wo = H, W

    # Images per grid step: enough to make the output slab lane-dense (>=128 lanes).
    Nb = max(1, min(max_images_per_step, (lane_target + Wo - 1) // Wo))
    G = (N + Nb - 1) // Nb
    Npad = G * Nb

    x = x_nchw                                         # keep native dtype (no host upcast)
    if Npad != N:
        x = jnp.concatenate([x, jnp.zeros((Npad - N, C, H, W), x.dtype)], axis=0)

    in_specs = [
        pl.BlockSpec((Nb, C, H, W), lambda g: (g, 0, 0, 0)),
        pl.BlockSpec(memory_space=pltpu.MemorySpace.SMEM),
        pl.BlockSpec(memory_space=pltpu.MemorySpace.SMEM),
    ]
    args = [x, w_flat, b]

    if do_up:
        A = jnp.asarray(_interp_matrix(Ho, H, s))                                # (Ho, H)
        Bt_np = _interp_matrix(Wo, W, s).T                                       # (W, Wo)
        Bt_blk = jnp.asarray(np.kron(np.eye(Nb, dtype=np.float32), Bt_np))       # (Nb*W, Nb*Wo)
        in_specs += [
            pl.BlockSpec((Ho, H), lambda g: (0, 0)),
            pl.BlockSpec((Nb * W, Nb * Wo), lambda g: (0, 0)),
        ]
        args += [A, Bt_blk]

    out_shape = jax.ShapeDtypeStruct((G, Ho, Nb * Wo), jnp.float32)
    out_specs = pl.BlockSpec((1, Ho, Nb * Wo), lambda g: (g, 0, 0))

    # Scoped-VMEM limit sized to the (lane-padded, double-buffered) blocks.
    in_itemsize = jnp.dtype(x.dtype).itemsize
    est = 2 * Nb * C * _padded_bytes(H, W, in_itemsize)       # input, double-buffered
    est += 2 * _padded_bytes(Ho, Nb * Wo, 4)                  # output, double-buffered
    if do_up:
        est += 2 * (_padded_bytes(Ho, H, 4) + _padded_bytes(Nb * W, Nb * Wo, 4))
        est += _padded_bytes(Ho, Nb * W, 4)                   # matmul intermediate
    vmem_limit = int(min(100 << 20, max(16 << 20, 2 * est)))

    kernel = functools.partial(_disp_head_kernel, Nb=Nb, C=C, H=H, W=W, upsample=do_up)
    y = pl.pallas_call(
        kernel,
        out_shape=out_shape,
        grid=(G,),
        in_specs=in_specs,
        out_specs=out_specs,
        compiler_params=pltpu.CompilerParams(
            dimension_semantics=("parallel",),
            vmem_limit_bytes=vmem_limit,
        ),
    )(*args)

    # Un-pack the lane-dense slab back to NCHW: (G, Ho, Nb*Wo) -> (N, 1, Ho, Wo).
    y = y.reshape(G, Ho, Nb, Wo).transpose(0, 2, 1, 3).reshape(Npad, Ho, Wo)
    return y[:N, None, :, :]


# ----------------------------------- main ----------------------------------- #

if __name__ == "__main__":
    N, C, H, W = 2, 4, 16, 16
    scale = 2

    key = jax.random.PRNGKey(0)
    kx, kw_, kb = jax.random.split(key, 3)
    x = jax.random.normal(kx, (N, C, H, W), dtype=jnp.float32)
    # Deterministic synthetic parameters (conv1: out=1, in=C, k=3).
    weight = 0.1 * jax.random.normal(kw_, (1, C, 3, 3), dtype=jnp.float32)
    bias = 0.1 * jax.random.normal(kb, (1,), dtype=jnp.float32)

    out = jax.block_until_ready(disp_head_forward(x, scale, weight, bias))
    assert out.shape == (N, 1, H * scale, W * scale), out.shape

    # Reference check against plain JAX (same math, XLA ops).
    ref = jax.lax.conv_general_dilated(
        x, weight, (1, 1), "SAME", dimension_numbers=("NCHW", "OIHW", "NCHW"))
    ref = jax.nn.sigmoid(ref + bias.reshape(1, 1, 1, 1))
    A = jnp.asarray(_interp_matrix(H * scale, H, float(scale)))
    Bt = jnp.asarray(_interp_matrix(W * scale, W, float(scale)).T)
    ref_up = jnp.einsum("ih,nchw,wj->ncij", A, ref, Bt)
    # Tolerance accounts for the EUP approximate reciprocal in the sigmoid.
    np.testing.assert_allclose(np.asarray(out), np.asarray(ref_up), atol=5e-3, rtol=5e-3)

    # Also exercise the scale == 1 path (no upsample branch).
    out1 = jax.block_until_ready(disp_head_forward(x, 1, weight, bias))
    assert out1.shape == (N, 1, H, W), out1.shape
    np.testing.assert_allclose(np.asarray(out1), np.asarray(ref), atol=5e-3, rtol=5e-3)

    print("KERNEL_OK")
</pallas_src>

<mosaic_0001>
module attributes {stable_mosaic.version = 11 : i64} {
  func.func @_disp_head_kernel(%arg0: i32, %arg1: memref<4x4x16x16xf32, #tpu.memory_space<vmem>>, %arg2: memref<36xf32, #tpu.memory_space<smem>>, %arg3: memref<1xf32, #tpu.memory_space<smem>>, %arg4: memref<32x16xf32, #tpu.memory_space<vmem>>, %arg5: memref<64x128xf32, #tpu.memory_space<vmem>>, %arg6: memref<1x32x128xf32, #tpu.memory_space<vmem>>) attributes {dimension_semantics = [#tpu.dimension_semantics<parallel>], iteration_bounds = array<i64: 1>, scalar_prefetch = 0 : i64, scratch_operands = 0 : i64, tpu.core_type = #tpu.core_type<tc>, window_params = [{transform_indices = @transform_0, window_bounds = array<i64: 4, 4, 16, 16>}, {transform_indices = @transform_1, window_bounds = array<i64: 36>}, {transform_indices = @transform_2, window_bounds = array<i64: 1>}, {pipeline_mode = #tpu.pipeline_mode<synchronous>, transform_indices = @transform_3, window_bounds = array<i64: 32, 16>}, {pipeline_mode = #tpu.pipeline_mode<synchronous>, transform_indices = @transform_4, window_bounds = array<i64: 64, 128>}, {transform_indices = @transform_5, window_bounds = array<i64: 1, 32, 128>}]} {
    %cst = arith.constant 0.000000e+00 : f32
    %0 = vector.broadcast %cst : f32 to vector<16x16xf32>
    %cst_0 = arith.constant 0.000000e+00 : f32
    %1 = vector.broadcast %cst_0 : f32 to vector<16x16xf32>
    %cst_1 = arith.constant 0.000000e+00 : f32
    %2 = vector.broadcast %cst_1 : f32 to vector<16x16xf32>
    %cst_2 = arith.constant 0.000000e+00 : f32
    %3 = vector.broadcast %cst_2 : f32 to vector<16x16xf32>
    %cst_3 = arith.constant 0.000000e+00 : f32
    %4 = vector.broadcast %cst_3 : f32 to vector<16x16xf32>
    %cst_4 = arith.constant 0.000000e+00 : f32
    %5 = vector.broadcast %cst_4 : f32 to vector<16x16xf32>
    %cst_5 = arith.constant 0.000000e+00 : f32
    %6 = vector.broadcast %cst_5 : f32 to vector<16x16xf32>
    %cst_6 = arith.constant 0.000000e+00 : f32
    %7 = vector.broadcast %cst_6 : f32 to vector<16x16xf32>
    %cst_7 = arith.constant 0.000000e+00 : f32
    %8 = vector.broadcast %cst_7 : f32 to vector<16x16xf32>
    %c0 = arith.constant 0 : index
    %c0_8 = arith.constant 0 : index
    %c0_9 = arith.constant 0 : index
    %c0_10 = arith.constant 0 : index
    %9 = vector.load %arg1[%c0, %c0_8, %c0_9, %c0_10] : memref<4x4x16x16xf32, #tpu.memory_space<vmem>>, vector<1x1x16x16xf32>
    %10 = vector.shape_cast %9 : vector<1x1x16x16xf32> to vector<16x16xf32>
    %c0_11 = arith.constant 0 : index
    %11 = memref.load %arg2[%c0_11] : memref<36xf32, #tpu.memory_space<smem>>
    %12 = vector.broadcast %11 : f32 to vector<16x16xf32>
    %13 = arith.mulf %12, %10 : vector<16x16xf32>
    %14 = arith.addf %0, %13 : vector<16x16xf32>
    %c1 = arith.constant 1 : index
    %15 = memref.load %arg2[%c1] : memref<36xf32, #tpu.memory_space<smem>>
    %16 = vector.broadcast %15 : f32 to vector<16x16xf32>
    %17 = arith.mulf %16, %10 : vector<16x16xf32>
    %18 = arith.addf %1, %17 : vector<16x16xf32>
    %c2 = arith.constant 2 : index
    %19 = memref.load %arg2[%c2] : memref<36xf32, #tpu.memory_space<smem>>
    %20 = vector.broadcast %19 : f32 to vector<16x16xf32>
    %21 = arith.mulf %20, %10 : vector<16x16xf32>
    %22 = arith.addf %2, %21 : vector<16x16xf32>
    %c3 = arith.constant 3 : index
    %23 = memref.load %arg2[%c3] : memref<36xf32, #tpu.memory_space<smem>>
    %24 = vector.broadcast %23 : f32 to vector<16x16xf32>
    %25 = arith.mulf %24, %10 : vector<16x16xf32>
    %26 = arith.addf %3, %25 : vector<16x16xf32>
    %c4 = arith.constant 4 : index
    %27 = memref.load %arg2[%c4] : memref<36xf32, #tpu.memory_space<smem>>
    %28 = vector.broadcast %27 : f32 to vector<16x16xf32>
    %29 = arith.mulf %28, %10 : vector<16x16xf32>
    %30 = arith.addf %4, %29 : vector<16x16xf32>
    %c5 = arith.constant 5 : index
    %31 = memref.load %arg2[%c5] : memref<36xf32, #tpu.memory_space<smem>>
    %32 = vector.broadcast %31 : f32 to vector<16x16xf32>
    %33 = arith.mulf %32, %10 : vector<16x16xf32>
    %34 = arith.addf %5, %33 : vector<16x16xf32>
    %c6 = arith.constant 6 : index
    %35 = memref.load %arg2[%c6] : memref<36xf32, #tpu.memory_space<smem>>
    %36 = vector.broadcast %35 : f32 to vector<16x16xf32>
    %37 = arith.mulf %36, %10 : vector<16x16xf32>
    %38 = arith.addf %6, %37 : vector<16x16xf32>
    %c7 = arith.constant 7 : index
    %39 = memref.load %arg2[%c7] : memref<36xf32, #tpu.memory_space<smem>>
    %40 = vector.broadcast %39 : f32 to vector<16x16xf32>
    %41 = arith.mulf %40, %10 : vector<16x16xf32>
    %42 = arith.addf %7, %41 : vector<16x16xf32>
    %c8 = arith.constant 8 : index
    %43 = memref.load %arg2[%c8] : memref<36xf32, #tpu.memory_space<smem>>
    %44 = vector.broadcast %43 : f32 to vector<16x16xf32>
    %45 = arith.mulf %44, %10 : vector<16x16xf32>
    %46 = arith.addf %8, %45 : vector<16x16xf32>
    %c0_12 = arith.constant 0 : index
    %c1_13 = arith.constant 1 : index
    %c0_14 = arith.constant 0 : index
    %c0_15 = arith.constant 0 : index
    %47 = vector.load %arg1[%c0_12, %c1_13, %c0_14, %c0_15] : memref<4x4x16x16xf32, #tpu.memory_space<vmem>>, vector<1x1x16x16xf32>
    %48 = vector.shape_cast %47 : vector<1x1x16x16xf32> to vector<16x16xf32>
    %c9 = arith.constant 9 : index
    %49 = memref.load %arg2[%c9] : memref<36xf32, #tpu.memory_space<smem>>
    %50 = vector.broadcast %49 : f32 to vector<16x16xf32>
    %51 = arith.mulf %50, %48 : vector<16x16xf32>
    %52 = arith.addf %14, %51 : vector<16x16xf32>
    %c10 = arith.constant 10 : index
    %53 = memref.load %arg2[%c10] : memref<36xf32, #tpu.memory_space<smem>>
    %54 = vector.broadcast %53 : f32 to vector<16x16xf32>
    %55 = arith.mulf %54, %48 : vector<16x16xf32>
    %56 = arith.addf %18, %55 : vector<16x16xf32>
    %c11 = arith.constant 11 : index
    %57 = memref.load %arg2[%c11] : memref<36xf32, #tpu.memory_space<smem>>
    %58 = vector.broadcast %57 : f32 to vector<16x16xf32>
    %59 = arith.mulf %58, %48 : vector<16x16xf32>
    %60 = arith.addf %22, %59 : vector<16x16xf32>
    %c12 = arith.constant 12 : index
    %61 = memref.load %arg2[%c12] : memref<36xf32, #tpu.memory_space<smem>>
    %62 = vector.broadcast %61 : f32 to vector<16x16xf32>
    %63 = arith.mulf %62, %48 : vector<16x16xf32>
    %64 = arith.addf %26, %63 : vector<16x16xf32>
    %c13 = arith.constant 13 : index
    %65 = memref.load %arg2[%c13] : memref<36xf32, #tpu.memory_space<smem>>
    %66 = vector.broadcast %65 : f32 to vector<16x16xf32>
    %67 = arith.mulf %66, %48 : vector<16x16xf32>
    %68 = arith.addf %30, %67 : vector<16x16xf32>
    %c14 = arith.constant 14 : index
    %69 = memref.load %arg2[%c14] : memref<36xf32, #tpu.memory_space<smem>>
    %70 = vector.broadcast %69 : f32 to vector<16x16xf32>
    %71 = arith.mulf %70, %48 : vector<16x16xf32>
    %72 = arith.addf %34, %71 : vector<16x16xf32>
    %c15 = arith.constant 15 : index
    %73 = memref.load %arg2[%c15] : memref<36xf32, #tpu.memory_space<smem>>
    %74 = vector.broadcast %73 : f32 to vector<16x16xf32>
    %75 = arith.mulf %74, %48 : vector<16x16xf32>
    %76 = arith.addf %38, %75 : vector<16x16xf32>
    %c16 = arith.constant 16 : index
    %77 = memref.load %arg2[%c16] : memref<36xf32, #tpu.memory_space<smem>>
    %78 = vector.broadcast %77 : f32 to vector<16x16xf32>
    %79 = arith.mulf %78, %48 : vector<16x16xf32>
    %80 = arith.addf %42, %79 : vector<16x16xf32>
    %c17 = arith.constant 17 : index
    %81 = memref.load %arg2[%c17] : memref<36xf32, #tpu.memory_space<smem>>
    %82 = vector.broadcast %81 : f32 to vector<16x16xf32>
    %83 = arith.mulf %82, %48 : vector<16x16xf32>
    %84 = arith.addf %46, %83 : vector<16x16xf32>
    %c0_16 = arith.constant 0 : index
    %c2_17 = arith.constant 2 : index
    %c0_18 = arith.constant 0 : index
    %c0_19 = arith.constant 0 : index
    %85 = vector.load %arg1[%c0_16, %c2_17, %c0_18, %c0_19] : memref<4x4x16x16xf32, #tpu.memory_space<vmem>>, vector<1x1x16x16xf32>
    %86 = vector.shape_cast %85 : vector<1x1x16x16xf32> to vector<16x16xf32>
    %c18 = arith.constant 18 : index
    %87 = memref.load %arg2[%c18] : memref<36xf32, #tpu.memory_space<smem>>
    %88 = vector.broadcast %87 : f32 to vector<16x16xf32>
    %89 = arith.mulf %88, %86 : vector<16x16xf32>
    %90 = arith.addf %52, %89 : vector<16x16xf32>
    %c19 = arith.constant 19 : index
    %91 = memref.load %arg2[%c19] : memref<36xf32, #tpu.memory_space<smem>>
    %92 = vector.broadcast %91 : f32 to vector<16x16xf32>
    %93 = arith.mulf %92, %86 : vector<16x16xf32>
    %94 = arith.addf %56, %93 : vector<16x16xf32>
    %c20 = arith.constant 20 : index
    %95 = memref.load %arg2[%c20] : memref<36xf32, #tpu.memory_space<smem>>
    %96 = vector.broadcast %95 : f32 to vector<16x16xf32>
    %97 = arith.mulf %96, %86 : vector<16x16xf32>
    %98 = arith.addf %60, %97 : vector<16x16xf32>
    %c21 = arith.constant 21 : index
    %99 = memref.load %arg2[%c21] : memref<36xf32, #tpu.memory_space<smem>>
    %100 = vector.broadcast %99 : f32 to vector<16x16xf32>
    %101 = arith.mulf %100, %86 : vector<16x16xf32>
    %102 = arith.addf %64, %101 : vector<16x16xf32>
    %c22 = arith.constant 22 : index
    %103 = memref.load %arg2[%c22] : memref<36xf32, #tpu.memory_space<smem>>
    %104 = vector.broadcast %103 : f32 to vector<16x16xf32>
    %105 = arith.mulf %104, %86 : vector<16x16xf32>
    %106 = arith.addf %68, %105 : vector<16x16xf32>
    %c23 = arith.constant 23 : index
    %107 = memref.load %arg2[%c23] : memref<36xf32, #tpu.memory_space<smem>>
    %108 = vector.broadcast %107 : f32 to vector<16x16xf32>
    %109 = arith.mulf %108, %86 : vector<16x16xf32>
    %110 = arith.addf %72, %109 : vector<16x16xf32>
    %c24 = arith.constant 24 : index
    %111 = memref.load %arg2[%c24] : memref<36xf32, #tpu.memory_space<smem>>
    %112 = vector.broadcast %111 : f32 to vector<16x16xf32>
    %113 = arith.mulf %112, %86 : vector<16x16xf32>
    %114 = arith.addf %76, %113 : vector<16x16xf32>
    %c25 = arith.constant 25 : index
    %115 = memref.load %arg2[%c25] : memref<36xf32, #tpu.memory_space<smem>>
    %116 = vector.broadcast %115 : f32 to vector<16x16xf32>
    %117 = arith.mulf %116, %86 : vector<16x16xf32>
    %118 = arith.addf %80, %117 : vector<16x16xf32>
    %c26 = arith.constant 26 : index
    %119 = memref.load %arg2[%c26] : memref<36xf32, #tpu.memory_space<smem>>
    %120 = vector.broadcast %119 : f32 to vector<16x16xf32>
    %121 = arith.mulf %120, %86 : vector<16x16xf32>
    %122 = arith.addf %84, %121 : vector<16x16xf32>
    %c0_20 = arith.constant 0 : index
    %c3_21 = arith.constant 3 : index
    %c0_22 = arith.constant 0 : index
    %c0_23 = arith.constant 0 : index
    %123 = vector.load %arg1[%c0_20, %c3_21, %c0_22, %c0_23] : memref<4x4x16x16xf32, #tpu.memory_space<vmem>>, vector<1x1x16x16xf32>
    %124 = vector.shape_cast %123 : vector<1x1x16x16xf32> to vector<16x16xf32>
    %c27 = arith.constant 27 : index
    %125 = memref.load %arg2[%c27] : memref<36xf32, #tpu.memory_space<smem>>
    %126 = vector.broadcast %125 : f32 to vector<16x16xf32>
    %127 = arith.mulf %126, %124 : vector<16x16xf32>
    %128 = arith.addf %90, %127 : vector<16x16xf32>
    %c28 = arith.constant 28 : index
    %129 = memref.load %arg2[%c28] : memref<36xf32, #tpu.memory_space<smem>>
    %130 = vector.broadcast %129 : f32 to vector<16x16xf32>
    %131 = arith.mulf %130, %124 : vector<16x16xf32>
    %132 = arith.addf %94, %131 : vector<16x16xf32>
    %c29 = arith.constant 29 : index
    %133 = memref.load %arg2[%c29] : memref<36xf32, #tpu.memory_space<smem>>
    %134 = vector.broadcast %133 : f32 to vector<16x16xf32>
    %135 = arith.mulf %134, %124 : vector<16x16xf32>
    %136 = arith.addf %98, %135 : vector<16x16xf32>
    %c30 = arith.constant 30 : index
    %137 = memref.load %arg2[%c30] : memref<36xf32, #tpu.memory_space<smem>>
    %138 = vector.broadcast %137 : f32 to vector<16x16xf32>
    %139 = arith.mulf %138, %124 : vector<16x16xf32>
    %140 = arith.addf %102, %139 : vector<16x16xf32>
    %c31 = arith.constant 31 : index
    %141 = memref.load %arg2[%c31] : memref<36xf32, #tpu.memory_space<smem>>
    %142 = vector.broadcast %141 : f32 to vector<16x16xf32>
    %143 = arith.mulf %142, %124 : vector<16x16xf32>
    %144 = arith.addf %106, %143 : vector<16x16xf32>
    %c32 = arith.constant 32 : index
    %145 = memref.load %arg2[%c32] : memref<36xf32, #tpu.memory_space<smem>>
    %146 = vector.broadcast %145 : f32 to vector<16x16xf32>
    %147 = arith.mulf %146, %124 : vector<16x16xf32>
    %148 = arith.addf %110, %147 : vector<16x16xf32>
    %c33 = arith.constant 33 : index
    %149 = memref.load %arg2[%c33] : memref<36xf32, #tpu.memory_space<smem>>
    %150 = vector.broadcast %149 : f32 to vector<16x16xf32>
    %151 = arith.mulf %150, %124 : vector<16x16xf32>
    %152 = arith.addf %114, %151 : vector<16x16xf32>
    %c34 = arith.constant 34 : index
    %153 = memref.load %arg2[%c34] : memref<36xf32, #tpu.memory_space<smem>>
    %154 = vector.broadcast %153 : f32 to vector<16x16xf32>
    %155 = arith.mulf %154, %124 : vector<16x16xf32>
    %156 = arith.addf %118, %155 : vector<16x16xf32>
    %c35 = arith.constant 35 : index
    %157 = memref.load %arg2[%c35] : memref<36xf32, #tpu.memory_space<smem>>
    %158 = vector.broadcast %157 : f32 to vector<16x16xf32>
    %159 = arith.mulf %158, %124 : vector<16x16xf32>
    %160 = arith.addf %122, %159 : vector<16x16xf32>
    %c0_24 = arith.constant 0 : index
    %161 = memref.load %arg3[%c0_24] : memref<1xf32, #tpu.memory_space<smem>>
    %162 = vector.broadcast %161 : f32 to vector<16x16xf32>
    %cst_25 = arith.constant 0.000000e+00 : f32
    %163 = vector.broadcast %cst_25 : f32 to vector<1x16xf32>
    %164 = vector.extract_strided_slice %128 {offsets = [0, 0], sizes = [15, 16], strides = [1, 1]} : vector<16x16xf32> to vector<15x16xf32>
    %165 = tpu.concatenate %163, %164 in 0 : vector<1x16xf32>, vector<15x16xf32> -> vector<16x16xf32>
    %cst_26 = arith.constant 0.000000e+00 : f32
    %166 = vector.broadcast %cst_26 : f32 to vector<16x1xf32>
    %167 = vector.extract_strided_slice %165 {offsets = [0, 0], sizes = [16, 15], strides = [1, 1]} : vector<16x16xf32> to vector<16x15xf32>
    %168 = tpu.concatenate %166, %167 in 1 : vector<16x1xf32>, vector<16x15xf32> -> vector<16x16xf32>
    %169 = arith.addf %162, %168 : vector<16x16xf32>
    %cst_27 = arith.constant 0.000000e+00 : f32
    %170 = vector.broadcast %cst_27 : f32 to vector<1x16xf32>
    %171 = vector.extract_strided_slice %132 {offsets = [0, 0], sizes = [15, 16], strides = [1, 1]} : vector<16x16xf32> to vector<15x16xf32>
    %172 = tpu.concatenate %170, %171 in 0 : vector<1x16xf32>, vector<15x16xf32> -> vector<16x16xf32>
    %173 = arith.addf %169, %172 : vector<16x16xf32>
    %cst_28 = arith.constant 0.000000e+00 : f32
    %174 = vector.broadcast %cst_28 : f32 to vector<1x16xf32>
    %175 = vector.extract_strided_slice %136 {offsets = [0, 0], sizes = [15, 16], strides = [1, 1]} : vector<16x16xf32> to vector<15x16xf32>
    %176 = tpu.concatenate %174, %175 in 0 : vector<1x16xf32>, vector<15x16xf32> -> vector<16x16xf32>
    %177 = vector.extract_strided_slice %176 {offsets = [0, 1], sizes = [16, 15], strides = [1, 1]} : vector<16x16xf32> to vector<16x15xf32>
    %cst_29 = arith.constant 0.000000e+00 : f32
    %178 = vector.broadcast %cst_29 : f32 to vector<16x1xf32>
    %179 = tpu.concatenate %177, %178 in 1 : vector<16x15xf32>, vector<16x1xf32> -> vector<16x16xf32>
    %180 = arith.addf %173, %179 : vector<16x16xf32>
    %cst_30 = arith.constant 0.000000e+00 : f32
    %181 = vector.broadcast %cst_30 : f32 to vector<16x1xf32>
    %182 = vector.extract_strided_slice %140 {offsets = [0, 0], sizes = [16, 15], strides = [1, 1]} : vector<16x16xf32> to vector<16x15xf32>
    %183 = tpu.concatenate %181, %182 in 1 : vector<16x1xf32>, vector<16x15xf32> -> vector<16x16xf32>
    %184 = arith.addf %180, %183 : vector<16x16xf32>
    %185 = arith.addf %184, %144 : vector<16x16xf32>
    %186 = vector.extract_strided_slice %148 {offsets = [0, 1], sizes = [16, 15], strides = [1, 1]} : vector<16x16xf32> to vector<16x15xf32>
    %cst_31 = arith.constant 0.000000e+00 : f32
    %187 = vector.broadcast %cst_31 : f32 to vector<16x1xf32>
    %188 = tpu.concatenate %186, %187 in 1 : vector<16x15xf32>, vector<16x1xf32> -> vector<16x16xf32>
    %189 = arith.addf %185, %188 : vector<16x16xf32>
    %190 = vector.extract_strided_slice %152 {offsets = [1, 0], sizes = [15, 16], strides = [1, 1]} : vector<16x16xf32> to vector<15x16xf32>
    %cst_32 = arith.constant 0.000000e+00 : f32
    %191 = vector.broadcast %cst_32 : f32 to vector<1x16xf32>
    %192 = tpu.concatenate %190, %191 in 0 : vector<15x16xf32>, vector<1x16xf32> -> vector<16x16xf32>
    %cst_33 = arith.constant 0.000000e+00 : f32
    %193 = vector.broadcast %cst_33 : f32 to vector<16x1xf32>
    %194 = vector.extract_strided_slice %192 {offsets = [0, 0], sizes = [16, 15], strides = [1, 1]} : vector<16x16xf32> to vector<16x15xf32>
    %195 = tpu.concatenate %193, %194 in 1 : vector<16x1xf32>, vector<16x15xf32> -> vector<16x16xf32>
    %196 = arith.addf %189, %195 : vector<16x16xf32>
    %197 = vector.extract_strided_slice %156 {offsets = [1, 0], sizes = [15, 16], strides = [1, 1]} : vector<16x16xf32> to vector<15x16xf32>
    %cst_34 = arith.constant 0.000000e+00 : f32
    %198 = vector.broadcast %cst_34 : f32 to vector<1x16xf32>
    %199 = tpu.concatenate %197, %198 in 0 : vector<15x16xf32>, vector<1x16xf32> -> vector<16x16xf32>
    %200 = arith.addf %196, %199 : vector<16x16xf32>
    %201 = vector.extract_strided_slice %160 {offsets = [1, 0], sizes = [15, 16], strides = [1, 1]} : vector<16x16xf32> to vector<15x16xf32>
    %cst_35 = arith.constant 0.000000e+00 : f32
    %202 = vector.broadcast %cst_35 : f32 to vector<1x16xf32>
    %203 = tpu.concatenate %201, %202 in 0 : vector<15x16xf32>, vector<1x16xf32> -> vector<16x16xf32>
    %204 = vector.extract_strided_slice %203 {offsets = [0, 1], sizes = [16, 15], strides = [1, 1]} : vector<16x16xf32> to vector<16x15xf32>
    %cst_36 = arith.constant 0.000000e+00 : f32
    %205 = vector.broadcast %cst_36 : f32 to vector<16x1xf32>
    %206 = tpu.concatenate %204, %205 in 1 : vector<16x15xf32>, vector<16x1xf32> -> vector<16x16xf32>
    %207 = arith.addf %200, %206 : vector<16x16xf32>
    %cst_37 = arith.constant 0.000000e+00 : f32
    %208 = vector.broadcast %cst_37 : f32 to vector<16x16xf32>
    %209 = arith.subf %208, %207 : vector<16x16xf32>
    %210 = math.exp %209 : vector<16x16xf32>
    %cst_38 = arith.constant 1.000000e+00 : f32
    %211 = vector.broadcast %cst_38 : f32 to vector<16x16xf32>
    %212 = arith.addf %211, %210 : vector<16x16xf32>
    %213 = tpu.reciprocal %212 {approx = true} : vector<16x16xf32> -> vector<16x16xf32>
    %cst_39 = arith.constant 0.000000e+00 : f32
    %214 = vector.broadcast %cst_39 : f32 to vector<16x16xf32>
    %cst_40 = arith.constant 0.000000e+00 : f32
    %215 = vector.broadcast %cst_40 : f32 to vector<16x16xf32>
    %cst_41 = arith.constant 0.000000e+00 : f32
    %216 = vector.broadcast %cst_41 : f32 to vector<16x16xf32>
    %cst_42 = arith.constant 0.000000e+00 : f32
    %217 = vector.broadcast %cst_42 : f32 to vector<16x16xf32>
    %cst_43 = arith.constant 0.000000e+00 : f32
    %218 = vector.broadcast %cst_43 : f32 to vector<16x16xf32>
    %cst_44 = arith.constant 0.000000e+00 : f32
    %219 = vector.broadcast %cst_44 : f32 to vector<16x16xf32>
    %cst_45 = arith.constant 0.000000e+00 : f32
    %220 = vector.broadcast %cst_45 : f32 to vector<16x16xf32>
    %cst_46 = arith.constant 0.000000e+00 : f32
    %221 = vector.broadcast %cst_46 : f32 to vector<16x16xf32>
    %cst_47 = arith.constant 0.000000e+00 : f32
    %222 = vector.broadcast %cst_47 : f32 to vector<16x16xf32>
    %c1_48 = arith.constant 1 : index
    %c0_49 = arith.constant 0 : index
    %c0_50 = arith.constant 0 : index
    %c0_51 = arith.constant 0 : index
    %223 = vector.load %arg1[%c1_48, %c0_49, %c0_50, %c0_51] : memref<4x4x16x16xf32, #tpu.memory_space<vmem>>, vector<1x1x16x16xf32>
    %224 = vector.shape_cast %223 : vector<1x1x16x16xf32> to vector<16x16xf32>
    %c0_52 = arith.constant 0 : index
    %225 = memref.load %arg2[%c0_52] : memref<36xf32, #tpu.memory_space<smem>>
    %226 = vector.broadcast %225 : f32 to vector<16x16xf32>
    %227 = arith.mulf %226, %224 : vector<16x16xf32>
    %228 = arith.addf %214, %227 : vector<16x16xf32>
    %c1_53 = arith.constant 1 : index
    %229 = memref.load %arg2[%c1_53] : memref<36xf32, #tpu.memory_space<smem>>
    %230 = vector.broadcast %229 : f32 to vector<16x16xf32>
    %231 = arith.mulf %230, %224 : vector<16x16xf32>
    %232 = arith.addf %215, %231 : vector<16x16xf32>
    %c2_54 = arith.constant 2 : index
    %233 = memref.load %arg2[%c2_54] : memref<36xf32, #tpu.memory_space<smem>>
    %234 = vector.broadcast %233 : f32 to vector<16x16xf32>
    %235 = arith.mulf %234, %224 : vector<16x16xf32>
    %236 = arith.addf %216, %235 : vector<16x16xf32>
    %c3_55 = arith.constant 3 : index
    %237 = memref.load %arg2[%c3_55] : memref<36xf32, #tpu.memory_space<smem>>
    %238 = vector.broadcast %237 : f32 to vector<16x16xf32>
    %239 = arith.mulf %238, %224 : vector<16x16xf32>
    %240 = arith.addf %217, %239 : vector<16x16xf32>
    %c4_56 = arith.constant 4 : index
    %241 = memref.load %arg2[%c4_56] : memref<36xf32, #tpu.memory_space<smem>>
    %242 = vector.broadcast %241 : f32 to vector<16x16xf32>
    %243 = arith.mulf %242, %224 : vector<16x16xf32>
    %244 = arith.addf %218, %243 : vector<16x16xf32>
    %c5_57 = arith.constant 5 : index
    %245 = memref.load %arg2[%c5_57] : memref<36xf32, #tpu.memory_space<smem>>
    %246 = vector.broadcast %245 : f32 to vector<16x16xf32>
    %247 = arith.mulf %246, %224 : vector<16x16xf32>
    %248 = arith.addf %219, %247 : vector<16x16xf32>
    %c6_58 = arith.constant 6 : index
    %249 = memref.load %arg2[%c6_58] : memref<36xf32, #tpu.memory_space<smem>>
    %250 = vector.broadcast %249 : f32 to vector<16x16xf32>
    %251 = arith.mulf %250, %224 : vector<16x16xf32>
    %252 = arith.addf %220, %251 : vector<16x16xf32>
    %c7_59 = arith.constant 7 : index
    %253 = memref.load %arg2[%c7_59] : memref<36xf32, #tpu.memory_space<smem>>
    %254 = vector.broadcast %253 : f32 to vector<16x16xf32>
    %255 = arith.mulf %254, %224 : vector<16x16xf32>
    %256 = arith.addf %221, %255 : vector<16x16xf32>
    %c8_60 = arith.constant 8 : index
    %257 = memref.load %arg2[%c8_60] : memref<36xf32, #tpu.memory_space<smem>>
    %258 = vector.broadcast %257 : f32 to vector<16x16xf32>
    %259 = arith.mulf %258, %224 : vector<16x16xf32>
    %260 = arith.addf %222, %259 : vector<16x16xf32>
    %c1_61 = arith.constant 1 : index
    %c1_62 = arith.constant 1 : index
    %c0_63 = arith.constant 0 : index
    %c0_64 = arith.constant 0 : index
    %261 = vector.load %arg1[%c1_61, %c1_62, %c0_63, %c0_64] : memref<4x4x16x16xf32, #tpu.memory_space<vmem>>, vector<1x1x16x16xf32>
    %262 = vector.shape_cast %261 : vector<1x1x16x16xf32> to vector<16x16xf32>
    %c9_65 = arith.constant 9 : index
    %263 = memref.load %arg2[%c9_65] : memref<36xf32, #tpu.memory_space<smem>>
    %264 = vector.broadcast %263 : f32 to vector<16x16xf32>
    %265 = arith.mulf %264, %262 : vector<16x16xf32>
    %266 = arith.addf %228, %265 : vector<16x16xf32>
    %c10_66 = arith.constant 10 : index
    %267 = memref.load %arg2[%c10_66] : memref<36xf32, #tpu.memory_space<smem>>
    %268 = vector.broadcast %267 : f32 to vector<16x16xf32>
    %269 = arith.mulf %268, %262 : vector<16x16xf32>
    %270 = arith.addf %232, %269 : vector<16x16xf32>
    %c11_67 = arith.constant 11 : index
    %271 = memref.load %arg2[%c11_67] : memref<36xf32, #tpu.memory_space<smem>>
    %272 = vector.broadcast %271 : f32 to vector<16x16xf32>
    %273 = arith.mulf %272, %262 : vector<16x16xf32>
    %274 = arith.addf %236, %273 : vector<16x16xf32>
    %c12_68 = arith.constant 12 : index
    %275 = memref.load %arg2[%c12_68] : memref<36xf32, #tpu.memory_space<smem>>
    %276 = vector.broadcast %275 : f32 to vector<16x16xf32>
    %277 = arith.mulf %276, %262 : vector<16x16xf32>
    %278 = arith.addf %240, %277 : vector<16x16xf32>
    %c13_69 = arith.constant 13 : index
    %279 = memref.load %arg2[%c13_69] : memref<36xf32, #tpu.memory_space<smem>>
    %280 = vector.broadcast %279 : f32 to vector<16x16xf32>
    %281 = arith.mulf %280, %262 : vector<16x16xf32>
    %282 = arith.addf %244, %281 : vector<16x16xf32>
    %c14_70 = arith.constant 14 : index
    %283 = memref.load %arg2[%c14_70] : memref<36xf32, #tpu.memory_space<smem>>
    %284 = vector.broadcast %283 : f32 to vector<16x16xf32>
    %285 = arith.mulf %284, %262 : vector<16x16xf32>
    %286 = arith.addf %248, %285 : vector<16x16xf32>
    %c15_71 = arith.constant 15 : index
    %287 = memref.load %arg2[%c15_71] : memref<36xf32, #tpu.memory_space<smem>>
    %288 = vector.broadcast %287 : f32 to vector<16x16xf32>
    %289 = arith.mulf %288, %262 : vector<16x16xf32>
    %290 = arith.addf %252, %289 : vector<16x16xf32>
    %c16_72 = arith.constant 16 : index
    %291 = memref.load %arg2[%c16_72] : memref<36xf32, #tpu.memory_space<smem>>
    %292 = vector.broadcast %291 : f32 to vector<16x16xf32>
    %293 = arith.mulf %292, %262 : vector<16x16xf32>
    %294 = arith.addf %256, %293 : vector<16x16xf32>
    %c17_73 = arith.constant 17 : index
    %295 = memref.load %arg2[%c17_73] : memref<36xf32, #tpu.memory_space<smem>>
    %296 = vector.broadcast %295 : f32 to vector<16x16xf32>
    %297 = arith.mulf %296, %262 : vector<16x16xf32>
    %298 = arith.addf %260, %297 : vector<16x16xf32>
    %c1_74 = arith.constant 1 : index
    %c2_75 = arith.constant 2 : index
    %c0_76 = arith.constant 0 : index
    %c0_77 = arith.constant 0 : index
    %299 = vector.load %arg1[%c1_74, %c2_75, %c0_76, %c0_77] : memref<4x4x16x16xf32, #tpu.memory_space<vmem>>, vector<1x1x16x16xf32>
    %300 = vector.shape_cast %299 : vector<1x1x16x16xf32> to vector<16x16xf32>
    %c18_78 = arith.constant 18 : index
    %301 = memref.load %arg2[%c18_78] : memref<36xf32, #tpu.memory_space<smem>>
    %302 = vector.broadcast %301 : f32 to vector<16x16xf32>
    %303 = arith.mulf %302, %300 : vector<16x16xf32>
    %304 = arith.addf %266, %303 : vector<16x16xf32>
    %c19_79 = arith.constant 19 : index
    %305 = memref.load %arg2[%c19_79] : memref<36xf32, #tpu.memory_space<smem>>
    %306 = vector.broadcast %305 : f32 to vector<16x16xf32>
    %307 = arith.mulf %306, %300 : vector<16x16xf32>
    %308 = arith.addf %270, %307 : vector<16x16xf32>
    %c20_80 = arith.constant 20 : index
    %309 = memref.load %arg2[%c20_80] : memref<36xf32, #tpu.memory_space<smem>>
    %310 = vector.broadcast %309 : f32 to vector<16x16xf32>
    %311 = arith.mulf %310, %300 : vector<16x16xf32>
    %312 = arith.addf %274, %311 : vector<16x16xf32>
    %c21_81 = arith.constant 21 : index
    %313 = memref.load %arg2[%c21_81] : memref<36xf32, #tpu.memory_space<smem>>
    %314 = vector.broadcast %313 : f32 to vector<16x16xf32>
    %315 = arith.mulf %314, %300 : vector<16x16xf32>
    %316 = arith.addf %278, %315 : vector<16x16xf32>
    %c22_82 = arith.constant 22 : index
    %317 = memref.load %arg2[%c22_82] : memref<36xf32, #tpu.memory_space<smem>>
    %318 = vector.broadcast %317 : f32 to vector<16x16xf32>
    %319 = arith.mulf %318, %300 : vector<16x16xf32>
    %320 = arith.addf %282, %319 : vector<16x16xf32>
    %c23_83 = arith.constant 23 : index
    %321 = memref.load %arg2[%c23_83] : memref<36xf32, #tpu.memory_space<smem>>
    %322 = vector.broadcast %321 : f32 to vector<16x16xf32>
    %323 = arith.mulf %322, %300 : vector<16x16xf32>
    %324 = arith.addf %286, %323 : vector<16x16xf32>
    %c24_84 = arith.constant 24 : index
    %325 = memref.load %arg2[%c24_84] : memref<36xf32, #tpu.memory_space<smem>>
    %326 = vector.broadcast %325 : f32 to vector<16x16xf32>
    %327 = arith.mulf %326, %300 : vector<16x16xf32>
    %328 = arith.addf %290, %327 : vector<16x16xf32>
    %c25_85 = arith.constant 25 : index
    %329 = memref.load %arg2[%c25_85] : memref<36xf32, #tpu.memory_space<smem>>
    %330 = vector.broadcast %329 : f32 to vector<16x16xf32>
    %331 = arith.mulf %330, %300 : vector<16x16xf32>
    %332 = arith.addf %294, %331 : vector<16x16xf32>
    %c26_86 = arith.constant 26 : index
    %333 = memref.load %arg2[%c26_86] : memref<36xf32, #tpu.memory_space<smem>>
    %334 = vector.broadcast %333 : f32 to vector<16x16xf32>
    %335 = arith.mulf %334, %300 : vector<16x16xf32>
    %336 = arith.addf %298, %335 : vector<16x16xf32>
    %c1_87 = arith.constant 1 : index
    %c3_88 = arith.constant 3 : index
    %c0_89 = arith.constant 0 : index
    %c0_90 = arith.constant 0 : index
    %337 = vector.load %arg1[%c1_87, %c3_88, %c0_89, %c0_90] : memref<4x4x16x16xf32, #tpu.memory_space<vmem>>, vector<1x1x16x16xf32>
    %338 = vector.shape_cast %337 : vector<1x1x16x16xf32> to vector<16x16xf32>
    %c27_91 = arith.constant 27 : index
    %339 = memref.load %arg2[%c27_91] : memref<36xf32, #tpu.memory_space<smem>>
    %340 = vector.broadcast %339 : f32 to vector<16x16xf32>
    %341 = arith.mulf %340, %338 : vector<16x16xf32>
    %342 = arith.addf %304, %341 : vector<16x16xf32>
    %c28_92 = arith.constant 28 : index
    %343 = memref.load %arg2[%c28_92] : memref<36xf32, #tpu.memory_space<smem>>
    %344 = vector.broadcast %343 : f32 to vector<16x16xf32>
    %345 = arith.mulf %344, %338 : vector<16x16xf32>
    %346 = arith.addf %308, %345 : vector<16x16xf32>
    %c29_93 = arith.constant 29 : index
    %347 = memref.load %arg2[%c29_93] : memref<36xf32, #tpu.memory_space<smem>>
    %348 = vector.broadcast %347 : f32 to vector<16x16xf32>
    %349 = arith.mulf %348, %338 : vector<16x16xf32>
    %350 = arith.addf %312, %349 : vector<16x16xf32>
    %c30_94 = arith.constant 30 : index
    %351 = memref.load %arg2[%c30_94] : memref<36xf32, #tpu.memory_space<smem>>
    %352 = vector.broadcast %351 : f32 to vector<16x16xf32>
    %353 = arith.mulf %352, %338 : vector<16x16xf32>
    %354 = arith.addf %316, %353 : vector<16x16xf32>
    %c31_95 = arith.constant 31 : index
    %355 = memref.load %arg2[%c31_95] : memref<36xf32, #tpu.memory_space<smem>>
    %356 = vector.broadcast %355 : f32 to vector<16x16xf32>
    %357 = arith.mulf %356, %338 : vector<16x16xf32>
    %358 = arith.addf %320, %357 : vector<16x16xf32>
    %c32_96 = arith.constant 32 : index
    %359 = memref.load %arg2[%c32_96] : memref<36xf32, #tpu.memory_space<smem>>
    %360 = vector.broadcast %359 : f32 to vector<16x16xf32>
    %361 = arith.mulf %360, %338 : vector<16x16xf32>
    %362 = arith.addf %324, %361 : vector<16x16xf32>
    %c33_97 = arith.constant 33 : index
    %363 = memref.load %arg2[%c33_97] : memref<36xf32, #tpu.memory_space<smem>>
    %364 = vector.broadcast %363 : f32 to vector<16x16xf32>
    %365 = arith.mulf %364, %338 : vector<16x16xf32>
    %366 = arith.addf %328, %365 : vector<16x16xf32>
    %c34_98 = arith.constant 34 : index
    %367 = memref.load %arg2[%c34_98] : memref<36xf32, #tpu.memory_space<smem>>
    %368 = vector.broadcast %367 : f32 to vector<16x16xf32>
    %369 = arith.mulf %368, %338 : vector<16x16xf32>
    %370 = arith.addf %332, %369 : vector<16x16xf32>
    %c35_99 = arith.constant 35 : index
    %371 = memref.load %arg2[%c35_99] : memref<36xf32, #tpu.memory_space<smem>>
    %372 = vector.broadcast %371 : f32 to vector<16x16xf32>
    %373 = arith.mulf %372, %338 : vector<16x16xf32>
    %374 = arith.addf %336, %373 : vector<16x16xf32>
    %c0_100 = arith.constant 0 : index
    %375 = memref.load %arg3[%c0_100] : memref<1xf32, #tpu.memory_space<smem>>
    %376 = vector.broadcast %375 : f32 to vector<16x16xf32>
    %cst_101 = arith.constant 0.000000e+00 : f32
    %377 = vector.broadcast %cst_101 : f32 to vector<1x16xf32>
    %378 = vector.extract_strided_slice %342 {offsets = [0, 0], sizes = [15, 16], strides = [1, 1]} : vector<16x16xf32> to vector<15x16xf32>
    %379 = tpu.concatenate %377, %378 in 0 : vector<1x16xf32>, vector<15x16xf32> -> vector<16x16xf32>
    %cst_102 = arith.constant 0.000000e+00 : f32
    %380 = vector.broadcast %cst_102 : f32 to vector<16x1xf32>
    %381 = vector.extract_strided_slice %379 {offsets = [0, 0], sizes = [16, 15], strides = [1, 1]} : vector<16x16xf32> to vector<16x15xf32>
    %382 = tpu.concatenate %380, %381 in 1 : vector<16x1xf32>, vector<16x15xf32> -> vector<16x16xf32>
    %383 = arith.addf %376, %382 : vector<16x16xf32>
    %cst_103 = arith.constant 0.000000e+00 : f32
    %384 = vector.broadcast %cst_103 : f32 to vector<1x16xf32>
    %385 = vector.extract_strided_slice %346 {offsets = [0, 0], sizes = [15, 16], strides = [1, 1]} : vector<16x16xf32> to vector<15x16xf32>
    %386 = tpu.concatenate %384, %385 in 0 : vector<1x16xf32>, vector<15x16xf32> -> vector<16x16xf32>
    %387 = arith.addf %383, %386 : vector<16x16xf32>
    %cst_104 = arith.constant 0.000000e+00 : f32
    %388 = vector.broadcast %cst_104 : f32 to vector<1x16xf32>
    %389 = vector.extract_strided_slice %350 {offsets = [0, 0], sizes = [15, 16], strides = [1, 1]} : vector<16x16xf32> to vector<15x16xf32>
    %390 = tpu.concatenate %388, %389 in 0 : vector<1x16xf32>, vector<15x16xf32> -> vector<16x16xf32>
    %391 = vector.extract_strided_slice %390 {offsets = [0, 1], sizes = [16, 15], strides = [1, 1]} : vector<16x16xf32> to vector<16x15xf32>
    %cst_105 = arith.constant 0.000000e+00 : f32
    %392 = vector.broadcast %cst_105 : f32 to vector<16x1xf32>
    %393 = tpu.concatenate %391, %392 in 1 : vector<16x15xf32>, vector<16x1xf32> -> vector<16x16xf32>
    %394 = arith.addf %387, %393 : vector<16x16xf32>
    %cst_106 = arith.constant 0.000000e+00 : f32
    %395 = vector.broadcast %cst_106 : f32 to vector<16x1xf32>
    %396 = vector.extract_strided_slice %354 {offsets = [0, 0], sizes = [16, 15], strides = [1, 1]} : vector<16x16xf32> to vector<16x15xf32>
    %397 = tpu.concatenate %395, %396 in 1 : vector<16x1xf32>, vector<16x15xf32> -> vector<16x16xf32>
    %398 = arith.addf %394, %397 : vector<16x16xf32>
    %399 = arith.addf %398, %358 : vector<16x16xf32>
    %400 = vector.extract_strided_slice %362 {offsets = [0, 1], sizes = [16, 15], strides = [1, 1]} : vector<16x16xf32> to vector<16x15xf32>
    %cst_107 = arith.constant 0.000000e+00 : f32
    %401 = vector.broadcast %cst_107 : f32 to vector<16x1xf32>
    %402 = tpu.concatenate %400, %401 in 1 : vector<16x15xf32>, vector<16x1xf32> -> vector<16x16xf32>
    %403 = arith.addf %399, %402 : vector<16x16xf32>
    %404 = vector.extract_strided_slice %366 {offsets = [1, 0], sizes = [15, 16], strides = [1, 1]} : vector<16x16xf32> to vector<15x16xf32>
    %cst_108 = arith.constant 0.000000e+00 : f32
    %405 = vector.broadcast %cst_108 : f32 to vector<1x16xf32>
    %406 = tpu.concatenate %404, %405 in 0 : vector<15x16xf32>, vector<1x16xf32> -> vector<16x16xf32>
    %cst_109 = arith.constant 0.000000e+00 : f32
    %407 = vector.broadcast %cst_109 : f32 to vector<16x1xf32>
    %408 = vector.extract_strided_slice %406 {offsets = [0, 0], sizes = [16, 15], strides = [1, 1]} : vector<16x16xf32> to vector<16x15xf32>
    %409 = tpu.concatenate %407, %408 in 1 : vector<16x1xf32>, vector<16x15xf32> -> vector<16x16xf32>
    %410 = arith.addf %403, %409 : vector<16x16xf32>
    %411 = vector.extract_strided_slice %370 {offsets = [1, 0], sizes = [15, 16], strides = [1, 1]} : vector<16x16xf32> to vector<15x16xf32>
    %cst_110 = arith.constant 0.000000e+00 : f32
    %412 = vector.broadcast %cst_110 : f32 to vector<1x16xf32>
    %413 = tpu.concatenate %411, %412 in 0 : vector<15x16xf32>, vector<1x16xf32> -> vector<16x16xf32>
    %414 = arith.addf %410, %413 : vector<16x16xf32>
    %415 = vector.extract_strided_slice %374 {offsets = [1, 0], sizes = [15, 16], strides = [1, 1]} : vector<16x16xf32> to vector<15x16xf32>
    %cst_111 = arith.constant 0.000000e+00 : f32
    %416 = vector.broadcast %cst_111 : f32 to vector<1x16xf32>
    %417 = tpu.concatenate %415, %416 in 0 : vector<15x16xf32>, vector<1x16xf32> -> vector<16x16xf32>
    %418 = vector.extract_strided_slice %417 {offsets = [0, 1], sizes = [16, 15], strides = [1, 1]} : vector<16x16xf32> to vector<16x15xf32>
    %cst_112 = arith.constant 0.000000e+00 : f32
    %419 = vector.broadcast %cst_112 : f32 to vector<16x1xf32>
    %420 = tpu.concatenate %418, %419 in 1 : vector<16x15xf32>, vector<16x1xf32> -> vector<16x16xf32>
    %421 = arith.addf %414, %420 : vector<16x16xf32>
    %cst_113 = arith.constant 0.000000e+00 : f32
    %422 = vector.broadcast %cst_113 : f32 to vector<16x16xf32>
    %423 = arith.subf %422, %421 : vector<16x16xf32>
    %424 = math.exp %423 : vector<16x16xf32>
    %cst_114 = arith.constant 1.000000e+00 : f32
    %425 = vector.broadcast %cst_114 : f32 to vector<16x16xf32>
    %426 = arith.addf %425, %424 : vector<16x16xf32>
    %427 = tpu.reciprocal %426 {approx = true} : vector<16x16xf32> -> vector<16x16xf32>
    %cst_115 = arith.constant 0.000000e+00 : f32
    %428 = vector.broadcast %cst_115 : f32 to vector<16x16xf32>
    %cst_116 = arith.constant 0.000000e+00 : f32
    %429 = vector.broadcast %cst_116 : f32 to vector<16x16xf32>
    %cst_117 = arith.constant 0.000000e+00 : f32
    %430 = vector.broadcast %cst_117 : f32 to vector<16x16xf32>
    %cst_118 = arith.constant 0.000000e+00 : f32
    %431 = vector.broadcast %cst_118 : f32 to vector<16x16xf32>
    %cst_119 = arith.constant 0.000000e+00 : f32
    %432 = vector.broadcast %cst_119 : f32 to vector<16x16xf32>
    %cst_120 = arith.constant 0.000000e+00 : f32
    %433 = vector.broadcast %cst_120 : f32 to vector<16x16xf32>
    %cst_121 = arith.constant 0.000000e+00 : f32
    %434 = vector.broadcast %cst_121 : f32 to vector<16x16xf32>
    %cst_122 = arith.constant 0.000000e+00 : f32
    %435 = vector.broadcast %cst_122 : f32 to vector<16x16xf32>
    %cst_123 = arith.constant 0.000000e+00 : f32
    %436 = vector.broadcast %cst_123 : f32 to vector<16x16xf32>
    %c2_124 = arith.constant 2 : index
    %c0_125 = arith.constant 0 : index
    %c0_126 = arith.constant 0 : index
    %c0_127 = arith.constant 0 : index
    %437 = vector.load %arg1[%c2_124, %c0_125, %c0_126, %c0_127] : memref<4x4x16x16xf32, #tpu.memory_space<vmem>>, vector<1x1x16x16xf32>
    %438 = vector.shape_cast %437 : vector<1x1x16x16xf32> to vector<16x16xf32>
    %c0_128 = arith.constant 0 : index
    %439 = memref.load %arg2[%c0_128] : memref<36xf32, #tpu.memory_space<smem>>
    %440 = vector.broadcast %439 : f32 to vector<16x16xf32>
    %441 = arith.mulf %440, %438 : vector<16x16xf32>
    %442 = arith.addf %428, %441 : vector<16x16xf32>
    %c1_129 = arith.constant 1 : index
    %443 = memref.load %arg2[%c1_129] : memref<36xf32, #tpu.memory_space<smem>>
    %444 = vector.broadcast %443 : f32 to vector<16x16xf32>
    %445 = arith.mulf %444, %438 : vector<16x16xf32>
    %446 = arith.addf %429, %445 : vector<16x16xf32>
    %c2_130 = arith.constant 2 : index
    %447 = memref.load %arg2[%c2_130] : memref<36xf32, #tpu.memory_space<smem>>
    %448 = vector.broadcast %447 : f32 to vector<16x16xf32>
    %449 = arith.mulf %448, %438 : vector<16x16xf32>
    %450 = arith.addf %430, %449 : vector<16x16xf32>
    %c3_131 = arith.constant 3 : index
    %451 = memref.load %arg2[%c3_131] : memref<36xf32, #tpu.memory_space<smem>>
    %452 = vector.broadcast %451 : f32 to vector<16x16xf32>
    %453 = arith.mulf %452, %438 : vector<16x16xf32>
    %454 = arith.addf %431, %453 : vector<16x16xf32>
    %c4_132 = arith.constant 4 : index
    %455 = memref.load %arg2[%c4_132] : memref<36xf32, #tpu.memory_space<smem>>
    %456 = vector.broadcast %455 : f32 to vector<16x16xf32>
    %457 = arith.mulf %456, %438 : vector<16x16xf32>
    %458 = arith.addf %432, %457 : vector<16x16xf32>
    %c5_133 = arith.constant 5 : index
    %459 = memref.load %arg2[%c5_133] : memref<36xf32, #tpu.memory_space<smem>>
    %460 = vector.broadcast %459 : f32 to vector<16x16xf32>
    %461 = arith.mulf %460, %438 : vector<16x16xf32>
    %462 = arith.addf %433, %461 : vector<16x16xf32>
    %c6_134 = arith.constant 6 : index
    %463 = memref.load %arg2[%c6_134] : memref<36xf32, #tpu.memory_space<smem>>
    %464 = vector.broadcast %463 : f32 to vector<16x16xf32>
    %465 = arith.mulf %464, %438 : vector<16x16xf32>
    %466 = arith.addf %434, %465 : vector<16x16xf32>
    %c7_135 = arith.constant 7 : index
    %467 = memref.load %arg2[%c7_135] : memref<36xf32, #tpu.memory_space<smem>>
    %468 = vector.broadcast %467 : f32 to vector<16x16xf32>
    %469 = arith.mulf %468, %438 : vector<16x16xf32>
    %470 = arith.addf %435, %469 : vector<16x16xf32>
    %c8_136 = arith.constant 8 : index
    %471 = memref.load %arg2[%c8_136] : memref<36xf32, #tpu.memory_space<smem>>
    %472 = vector.broadcast %471 : f32 to vector<16x16xf32>
    %473 = arith.mulf %472, %438 : vector<16x16xf32>
    %474 = arith.addf %436, %473 : vector<16x16xf32>
    %c2_137 = arith.constant 2 : index
    %c1_138 = arith.constant 1 : index
    %c0_139 = arith.constant 0 : index
    %c0_140 = arith.constant 0 : index
    %475 = vector.load %arg1[%c2_137, %c1_138, %c0_139, %c0_140] : memref<4x4x16x16xf32, #tpu.memory_space<vmem>>, vector<1x1x16x16xf32>
    %476 = vector.shape_cast %475 : vector<1x1x16x16xf32> to vector<16x16xf32>
    %c9_141 = arith.constant 9 : index
    %477 = memref.load %arg2[%c9_141] : memref<36xf32, #tpu.memory_space<smem>>
    %478 = vector.broadcast %477 : f32 to vector<16x16xf32>
    %479 = arith.mulf %478, %476 : vector<16x16xf32>
    %480 = arith.addf %442, %479 : vector<16x16xf32>
    %c10_142 = arith.constant 10 : index
    %481 = memref.load %arg2[%c10_142] : memref<36xf32, #tpu.memory_space<smem>>
    %482 = vector.broadcast %481 : f32 to vector<16x16xf32>
    %483 = arith.mulf %482, %476 : vector<16x16xf32>
    %484 = arith.addf %446, %483 : vector<16x16xf32>
    %c11_143 = arith.constant 11 : index
    %485 = memref.load %arg2[%c11_143] : memref<36xf32, #tpu.memory_space<smem>>
    %486 = vector.broadcast %485 : f32 to vector<16x16xf32>
    %487 = arith.mulf %486, %476 : vector<16x16xf32>
    %488 = arith.addf %450, %487 : vector<16x16xf32>
    %c12_144 = arith.constant 12 : index
    %489 = memref.load %arg2[%c12_144] : memref<36xf32, #tpu.memory_space<smem>>
    %490 = vector.broadcast %489 : f32 to vector<16x16xf32>
    %491 = arith.mulf %490, %476 : vector<16x16xf32>
    %492 = arith.addf %454, %491 : vector<16x16xf32>
    %c13_145 = arith.constant 13 : index
    %493 = memref.load %arg2[%c13_145] : memref<36xf32, #tpu.memory_space<smem>>
    %494 = vector.broadcast %493 : f32 to vector<16x16xf32>
    %495 = arith.mulf %494, %476 : vector<16x16xf32>
    %496 = arith.addf %458, %495 : vector<16x16xf32>
    %c14_146 = arith.constant 14 : index
    %497 = memref.load %arg2[%c14_146] : memref<36xf32, #tpu.memory_space<smem>>
    %498 = vector.broadcast %497 : f32 to vector<16x16xf32>
    %499 = arith.mulf %498, %476 : vector<16x16xf32>
    %500 = arith.addf %462, %499 : vector<16x16xf32>
    %c15_147 = arith.constant 15 : index
    %501 = memref.load %arg2[%c15_147] : memref<36xf32, #tpu.memory_space<smem>>
    %502 = vector.broadcast %501 : f32 to vector<16x16xf32>
    %503 = arith.mulf %502, %476 : vector<16x16xf32>
    %504 = arith.addf %466, %503 : vector<16x16xf32>
    %c16_148 = arith.constant 16 : index
    %505 = memref.load %arg2[%c16_148] : memref<36xf32, #tpu.memory_space<smem>>
    %506 = vector.broadcast %505 : f32 to vector<16x16xf32>
    %507 = arith.mulf %506, %476 : vector<16x16xf32>
    %508 = arith.addf %470, %507 : vector<16x16xf32>
    %c17_149 = arith.constant 17 : index
    %509 = memref.load %arg2[%c17_149] : memref<36xf32, #tpu.memory_space<smem>>
    %510 = vector.broadcast %509 : f32 to vector<16x16xf32>
    %511 = arith.mulf %510, %476 : vector<16x16xf32>
    %512 = arith.addf %474, %511 : vector<16x16xf32>
    %c2_150 = arith.constant 2 : index
    %c2_151 = arith.constant 2 : index
    %c0_152 = arith.constant 0 : index
    %c0_153 = arith.constant 0 : index
    %513 = vector.load %arg1[%c2_150, %c2_151, %c0_152, %c0_153] : memref<4x4x16x16xf32, #tpu.memory_space<vmem>>, vector<1x1x16x16xf32>
    %514 = vector.shape_cast %513 : vector<1x1x16x16xf32> to vector<16x16xf32>
    %c18_154 = arith.constant 18 : index
    %515 = memref.load %arg2[%c18_154] : memref<36xf32, #tpu.memory_space<smem>>
    %516 = vector.broadcast %515 : f32 to vector<16x16xf32>
    %517 = arith.mulf %516, %514 : vector<16x16xf32>
    %518 = arith.addf %480, %517 : vector<16x16xf32>
    %c19_155 = arith.constant 19 : index
    %519 = memref.load %arg2[%c19_155] : memref<36xf32, #tpu.memory_space<smem>>
    %520 = vector.broadcast %519 : f32 to vector<16x16xf32>
    %521 = arith.mulf %520, %514 : vector<16x16xf32>
    %522 = arith.addf %484, %521 : vector<16x16xf32>
    %c20_156 = arith.constant 20 : index
    %523 = memref.load %arg2[%c20_156] : memref<36xf32, #tpu.memory_space<smem>>
    %524 = vector.broadcast %523 : f32 to vector<16x16xf32>
    %525 = arith.mulf %524, %514 : vector<16x16xf32>
    %526 = arith.addf %488, %525 : vector<16x16xf32>
    %c21_157 = arith.constant 21 : index
    %527 = memref.load %arg2[%c21_157] : memref<36xf32, #tpu.memory_space<smem>>
    %528 = vector.broadcast %527 : f32 to vector<16x16xf32>
    %529 = arith.mulf %528, %514 : vector<16x16xf32>
    %530 = arith.addf %492, %529 : vector<16x16xf32>
    %c22_158 = arith.constant 22 : index
    %531 = memref.load %arg2[%c22_158] : memref<36xf32, #tpu.memory_space<smem>>
    %532 = vector.broadcast %531 : f32 to vector<16x16xf32>
    %533 = arith.mulf %532, %514 : vector<16x16xf32>
    %534 = arith.addf %496, %533 : vector<16x16xf32>
    %c23_159 = arith.constant 23 : index
    %535 = memref.load %arg2[%c23_159] : memref<36xf32, #tpu.memory_space<smem>>
    %536 = vector.broadcast %535 : f32 to vector<16x16xf32>
    %537 = arith.mulf %536, %514 : vector<16x16xf32>
    %538 = arith.addf %500, %537 : vector<16x16xf32>
    %c24_160 = arith.constant 24 : index
    %539 = memref.load %arg2[%c24_160] : memref<36xf32, #tpu.memory_space<smem>>
    %540 = vector.broadcast %539 : f32 to vector<16x16xf32>
    %541 = arith.mulf %540, %514 : vector<16x16xf32>
    %542 = arith.addf %504, %541 : vector<16x16xf32>
    %c25_161 = arith.constant 25 : index
    %543 = memref.load %arg2[%c25_161] : memref<36xf32, #tpu.memory_space<smem>>
    %544 = vector.broadcast %543 : f32 to vector<16x16xf32>
    %545 = arith.mulf %544, %514 : vector<16x16xf32>
    %546 = arith.addf %508, %545 : vector<16x16xf32>
    %c26_162 = arith.constant 26 : index
    %547 = memref.load %arg2[%c26_162] : memref<36xf32, #tpu.memory_space<smem>>
    %548 = vector.broadcast %547 : f32 to vector<16x16xf32>
    %549 = arith.mulf %548, %514 : vector<16x16xf32>
    %550 = arith.addf %512, %549 : vector<16x16xf32>
    %c2_163 = arith.constant 2 : index
    %c3_164 = arith.constant 3 : index
    %c0_165 = arith.constant 0 : index
    %c0_166 = arith.constant 0 : index
    %551 = vector.load %arg1[%c2_163, %c3_164, %c0_165, %c0_166] : memref<4x4x16x16xf32, #tpu.memory_space<vmem>>, vector<1x1x16x16xf32>
    %552 = vector.shape_cast %551 : vector<1x1x16x16xf32> to vector<16x16xf32>
    %c27_167 = arith.constant 27 : index
    %553 = memref.load %arg2[%c27_167] : memref<36xf32, #tpu.memory_space<smem>>
    %554 = vector.broadcast %553 : f32 to vector<16x16xf32>
    %555 = arith.mulf %554, %552 : vector<16x16xf32>
    %556 = arith.addf %518, %555 : vector<16x16xf32>
    %c28_168 = arith.constant 28 : index
    %557 = memref.load %arg2[%c28_168] : memref<36xf32, #tpu.memory_space<smem>>
    %558 = vector.broadcast %557 : f32 to vector<16x16xf32>
    %559 = arith.mulf %558, %552 : vector<16x16xf32>
    %560 = arith.addf %522, %559 : vector<16x16xf32>
    %c29_169 = arith.constant 29 : index
    %561 = memref.load %arg2[%c29_169] : memref<36xf32, #tpu.memory_space<smem>>
    %562 = vector.broadcast %561 : f32 to vector<16x16xf32>
    %563 = arith.mulf %562, %552 : vector<16x16xf32>
    %564 = arith.addf %526, %563 : vector<16x16xf32>
    %c30_170 = arith.constant 30 : index
    %565 = memref.load %arg2[%c30_170] : memref<36xf32, #tpu.memory_space<smem>>
    %566 = vector.broadcast %565 : f32 to vector<16x16xf32>
    %567 = arith.mulf %566, %552 : vector<16x16xf32>
    %568 = arith.addf %530, %567 : vector<16x16xf32>
    %c31_171 = arith.constant 31 : index
    %569 = memref.load %arg2[%c31_171] : memref<36xf32, #tpu.memory_space<smem>>
    %570 = vector.broadcast %569 : f32 to vector<16x16xf32>
    %571 = arith.mulf %570, %552 : vector<16x16xf32>
    %572 = arith.addf %534, %571 : vector<16x16xf32>
    %c32_172 = arith.constant 32 : index
    %573 = memref.load %arg2[%c32_172] : memref<36xf32, #tpu.memory_space<smem>>
    %574 = vector.broadcast %573 : f32 to vector<16x16xf32>
    %575 = arith.mulf %574, %552 : vector<16x16xf32>
    %576 = arith.addf %538, %575 : vector<16x16xf32>
    %c33_173 = arith.constant 33 : index
    %577 = memref.load %arg2[%c33_173] : memref<36xf32, #tpu.memory_space<smem>>
    %578 = vector.broadcast %577 : f32 to vector<16x16xf32>
    %579 = arith.mulf %578, %552 : vector<16x16xf32>
    %580 = arith.addf %542, %579 : vector<16x16xf32>
    %c34_174 = arith.constant 34 : index
    %581 = memref.load %arg2[%c34_174] : memref<36xf32, #tpu.memory_space<smem>>
    %582 = vector.broadcast %581 : f32 to vector<16x16xf32>
    %583 = arith.mulf %582, %552 : vector<16x16xf32>
    %584 = arith.addf %546, %583 : vector<16x16xf32>
    %c35_175 = arith.constant 35 : index
    %585 = memref.load %arg2[%c35_175] : memref<36xf32, #tpu.memory_space<smem>>
    %586 = vector.broadcast %585 : f32 to vector<16x16xf32>
    %587 = arith.mulf %586, %552 : vector<16x16xf32>
    %588 = arith.addf %550, %587 : vector<16x16xf32>
    %c0_176 = arith.constant 0 : index
    %589 = memref.load %arg3[%c0_176] : memref<1xf32, #tpu.memory_space<smem>>
    %590 = vector.broadcast %589 : f32 to vector<16x16xf32>
    %cst_177 = arith.constant 0.000000e+00 : f32
    %591 = vector.broadcast %cst_177 : f32 to vector<1x16xf32>
    %592 = vector.extract_strided_slice %556 {offsets = [0, 0], sizes = [15, 16], strides = [1, 1]} : vector<16x16xf32> to vector<15x16xf32>
    %593 = tpu.concatenate %591, %592 in 0 : vector<1x16xf32>, vector<15x16xf32> -> vector<16x16xf32>
    %cst_178 = arith.constant 0.000000e+00 : f32
    %594 = vector.broadcast %cst_178 : f32 to vector<16x1xf32>
    %595 = vector.extract_strided_slice %593 {offsets = [0, 0], sizes = [16, 15], strides = [1, 1]} : vector<16x16xf32> to vector<16x15xf32>
    %596 = tpu.concatenate %594, %595 in 1 : vector<16x1xf32>, vector<16x15xf32> -> vector<16x16xf32>
    %597 = arith.addf %590, %596 : vector<16x16xf32>
    %cst_179 = arith.constant 0.000000e+00 : f32
    %598 = vector.broadcast %cst_179 : f32 to vector<1x16xf32>
    %599 = vector.extract_strided_slice %560 {offsets = [0, 0], sizes = [15, 16], strides = [1, 1]} : vector<16x16xf32> to vector<15x16xf32>
    %600 = tpu.concatenate %598, %599 in 0 : vector<1x16xf32>, vector<15x16xf32> -> vector<16x16xf32>
    %601 = arith.addf %597, %600 : vector<16x16xf32>
    %cst_180 = arith.constant 0.000000e+00 : f32
    %602 = vector.broadcast %cst_180 : f32 to vector<1x16xf32>
    %603 = vector.extract_strided_slice %564 {offsets = [0, 0], sizes = [15, 16], strides = [1, 1]} : vector<16x16xf32> to vector<15x16xf32>
    %604 = tpu.concatenate %602, %603 in 0 : vector<1x16xf32>, vector<15x16xf32> -> vector<16x16xf32>
    %605 = vector.extract_strided_slice %604 {offsets = [0, 1], sizes = [16, 15], strides = [1, 1]} : vector<16x16xf32> to vector<16x15xf32>
    %cst_181 = arith.constant 0.000000e+00 : f32
    %606 = vector.broadcast %cst_181 : f32 to vector<16x1xf32>
    %607 = tpu.concatenate %605, %606 in 1 : vector<16x15xf32>, vector<16x1xf32> -> vector<16x16xf32>
    %608 = arith.addf %601, %607 : vector<16x16xf32>
    %cst_182 = arith.constant 0.000000e+00 : f32
    %609 = vector.broadcast %cst_182 : f32 to vector<16x1xf32>
    %610 = vector.extract_strided_slice %568 {offsets = [0, 0], sizes = [16, 15], strides = [1, 1]} : vector<16x16xf32> to vector<16x15xf32>
    %611 = tpu.concatenate %609, %610 in 1 : vector<16x1xf32>, vector<16x15xf32> -> vector<16x16xf32>
    %612 = arith.addf %608, %611 : vector<16x16xf32>
    %613 = arith.addf %612, %572 : vector<16x16xf32>
    %614 = vector.extract_strided_slice %576 {offsets = [0, 1], sizes = [16, 15], strides = [1, 1]} : vector<16x16xf32> to vector<16x15xf32>
    %cst_183 = arith.constant 0.000000e+00 : f32
    %615 = vector.broadcast %cst_183 : f32 to vector<16x1xf32>
    %616 = tpu.concatenate %614, %615 in 1 : vector<16x15xf32>, vector<16x1xf32> -> vector<16x16xf32>
    %617 = arith.addf %613, %616 : vector<16x16xf32>
    %618 = vector.extract_strided_slice %580 {offsets = [1, 0], sizes = [15, 16], strides = [1, 1]} : vector<16x16xf32> to vector<15x16xf32>
    %cst_184 = arith.constant 0.000000e+00 : f32
    %619 = vector.broadcast %cst_184 : f32 to vector<1x16xf32>
    %620 = tpu.concatenate %618, %619 in 0 : vector<15x16xf32>, vector<1x16xf32> -> vector<16x16xf32>
    %cst_185 = arith.constant 0.000000e+00 : f32
    %621 = vector.broadcast %cst_185 : f32 to vector<16x1xf32>
    %622 = vector.extract_strided_slice %620 {offsets = [0, 0], sizes = [16, 15], strides = [1, 1]} : vector<16x16xf32> to vector<16x15xf32>
    %623 = tpu.concatenate %621, %622 in 1 : vector<16x1xf32>, vector<16x15xf32> -> vector<16x16xf32>
    %624 = arith.addf %617, %623 : vector<16x16xf32>
    %625 = vector.extract_strided_slice %584 {offsets = [1, 0], sizes = [15, 16], strides = [1, 1]} : vector<16x16xf32> to vector<15x16xf32>
    %cst_186 = arith.constant 0.000000e+00 : f32
    %626 = vector.broadcast %cst_186 : f32 to vector<1x16xf32>
    %627 = tpu.concatenate %625, %626 in 0 : vector<15x16xf32>, vector<1x16xf32> -> vector<16x16xf32>
    %628 = arith.addf %624, %627 : vector<16x16xf32>
    %629 = vector.extract_strided_slice %588 {offsets = [1, 0], sizes = [15, 16], strides = [1, 1]} : vector<16x16xf32> to vector<15x16xf32>
    %cst_187 = arith.constant 0.000000e+00 : f32
    %630 = vector.broadcast %cst_187 : f32 to vector<1x16xf32>
    %631 = tpu.concatenate %629, %630 in 0 : vector<15x16xf32>, vector<1x16xf32> -> vector<16x16xf32>
    %632 = vector.extract_strided_slice %631 {offsets = [0, 1], sizes = [16, 15], strides = [1, 1]} : vector<16x16xf32> to vector<16x15xf32>
    %cst_188 = arith.constant 0.000000e+00 : f32
    %633 = vector.broadcast %cst_188 : f32 to vector<16x1xf32>
    %634 = tpu.concatenate %632, %633 in 1 : vector<16x15xf32>, vector<16x1xf32> -> vector<16x16xf32>
    %635 = arith.addf %628, %634 : vector<16x16xf32>
    %cst_189 = arith.constant 0.000000e+00 : f32
    %636 = vector.broadcast %cst_189 : f32 to vector<16x16xf32>
    %637 = arith.subf %636, %635 : vector<16x16xf32>
    %638 = math.exp %637 : vector<16x16xf32>
    %cst_190 = arith.constant 1.000000e+00 : f32
    %639 = vector.broadcast %cst_190 : f32 to vector<16x16xf32>
    %640 = arith.addf %639, %638 : vector<16x16xf32>
    %641 = tpu.reciprocal %640 {approx = true} : vector<16x16xf32> -> vector<16x16xf32>
    %cst_191 = arith.constant 0.000000e+00 : f32
    %642 = vector.broadcast %cst_191 : f32 to vector<16x16xf32>
    %cst_192 = arith.constant 0.000000e+00 : f32
    %643 = vector.broadcast %cst_192 : f32 to vector<16x16xf32>
    %cst_193 = arith.constant 0.000000e+00 : f32
    %644 = vector.broadcast %cst_193 : f32 to vector<16x16xf32>
    %cst_194 = arith.constant 0.000000e+00 : f32
    %645 = vector.broadcast %cst_194 : f32 to vector<16x16xf32>
    %cst_195 = arith.constant 0.000000e+00 : f32
    %646 = vector.broadcast %cst_195 : f32 to vector<16x16xf32>
    %cst_196 = arith.constant 0.000000e+00 : f32
    %647 = vector.broadcast %cst_196 : f32 to vector<16x16xf32>
    %cst_197 = arith.constant 0.000000e+00 : f32
    %648 = vector.broadcast %cst_197 : f32 to vector<16x16xf32>
    %cst_198 = arith.constant 0.000000e+00 : f32
    %649 = vector.broadcast %cst_198 : f32 to vector<16x16xf32>
    %cst_199 = arith.constant 0.000000e+00 : f32
    %650 = vector.broadcast %cst_199 : f32 to vector<16x16xf32>
    %c3_200 = arith.constant 3 : index
    %c0_201 = arith.constant 0 : index
    %c0_202 = arith.constant 0 : index
    %c0_203 = arith.constant 0 : index
    %651 = vector.load %arg1[%c3_200, %c0_201, %c0_202, %c0_203] : memref<4x4x16x16xf32, #tpu.memory_space<vmem>>, vector<1x1x16x16xf32>
    %652 = vector.shape_cast %651 : vector<1x1x16x16xf32> to vector<16x16xf32>
    %c0_204 = arith.constant 0 : index
    %653 = memref.load %arg2[%c0_204] : memref<36xf32, #tpu.memory_space<smem>>
    %654 = vector.broadcast %653 : f32 to vector<16x16xf32>
    %655 = arith.mulf %654, %652 : vector<16x16xf32>
    %656 = arith.addf %642, %655 : vector<16x16xf32>
    %c1_205 = arith.constant 1 : index
    %657 = memref.load %arg2[%c1_205] : memref<36xf32, #tpu.memory_space<smem>>
    %658 = vector.broadcast %657 : f32 to vector<16x16xf32>
    %659 = arith.mulf %658, %652 : vector<16x16xf32>
    %660 = arith.addf %643, %659 : vector<16x16xf32>
    %c2_206 = arith.constant 2 : index
    %661 = memref.load %arg2[%c2_206] : memref<36xf32, #tpu.memory_space<smem>>
    %662 = vector.broadcast %661 : f32 to vector<16x16xf32>
    %663 = arith.mulf %662, %652 : vector<16x16xf32>
    %664 = arith.addf %644, %663 : vector<16x16xf32>
    %c3_207 = arith.constant 3 : index
    %665 = memref.load %arg2[%c3_207] : memref<36xf32, #tpu.memory_space<smem>>
    %666 = vector.broadcast %665 : f32 to vector<16x16xf32>
    %667 = arith.mulf %666, %652 : vector<16x16xf32>
    %668 = arith.addf %645, %667 : vector<16x16xf32>
    %c4_208 = arith.constant 4 : index
    %669 = memref.load %arg2[%c4_208] : memref<36xf32, #tpu.memory_space<smem>>
    %670 = vector.broadcast %669 : f32 to vector<16x16xf32>
    %671 = arith.mulf %670, %652 : vector<16x16xf32>
    %672 = arith.addf %646, %671 : vector<16x16xf32>
    %c5_209 = arith.constant 5 : index
    %673 = memref.load %arg2[%c5_209] : memref<36xf32, #tpu.memory_space<smem>>
    %674 = vector.broadcast %673 : f32 to vector<16x16xf32>
    %675 = arith.mulf %674, %652 : vector<16x16xf32>
    %676 = arith.addf %647, %675 : vector<16x16xf32>
    %c6_210 = arith.constant 6 : index
    %677 = memref.load %arg2[%c6_210] : memref<36xf32, #tpu.memory_space<smem>>
    %678 = vector.broadcast %677 : f32 to vector<16x16xf32>
    %679 = arith.mulf %678, %652 : vector<16x16xf32>
    %680 = arith.addf %648, %679 : vector<16x16xf32>
    %c7_211 = arith.constant 7 : index
    %681 = memref.load %arg2[%c7_211] : memref<36xf32, #tpu.memory_space<smem>>
    %682 = vector.broadcast %681 : f32 to vector<16x16xf32>
    %683 = arith.mulf %682, %652 : vector<16x16xf32>
    %684 = arith.addf %649, %683 : vector<16x16xf32>
    %c8_212 = arith.constant 8 : index
    %685 = memref.load %arg2[%c8_212] : memref<36xf32, #tpu.memory_space<smem>>
    %686 = vector.broadcast %685 : f32 to vector<16x16xf32>
    %687 = arith.mulf %686, %652 : vector<16x16xf32>
    %688 = arith.addf %650, %687 : vector<16x16xf32>
    %c3_213 = arith.constant 3 : index
    %c1_214 = arith.constant 1 : index
    %c0_215 = arith.constant 0 : index
    %c0_216 = arith.constant 0 : index
    %689 = vector.load %arg1[%c3_213, %c1_214, %c0_215, %c0_216] : memref<4x4x16x16xf32, #tpu.memory_space<vmem>>, vector<1x1x16x16xf32>
    %690 = vector.shape_cast %689 : vector<1x1x16x16xf32> to vector<16x16xf32>
    %c9_217 = arith.constant 9 : index
    %691 = memref.load %arg2[%c9_217] : memref<36xf32, #tpu.memory_space<smem>>
    %692 = vector.broadcast %691 : f32 to vector<16x16xf32>
    %693 = arith.mulf %692, %690 : vector<16x16xf32>
    %694 = arith.addf %656, %693 : vector<16x16xf32>
    %c10_218 = arith.constant 10 : index
    %695 = memref.load %arg2[%c10_218] : memref<36xf32, #tpu.memory_space<smem>>
    %696 = vector.broadcast %695 : f32 to vector<16x16xf32>
    %697 = arith.mulf %696, %690 : vector<16x16xf32>
    %698 = arith.addf %660, %697 : vector<16x16xf32>
    %c11_219 = arith.constant 11 : index
    %699 = memref.load %arg2[%c11_219] : memref<36xf32, #tpu.memory_space<smem>>
    %700 = vector.broadcast %699 : f32 to vector<16x16xf32>
    %701 = arith.mulf %700, %690 : vector<16x16xf32>
    %702 = arith.addf %664, %701 : vector<16x16xf32>
    %c12_220 = arith.constant 12 : index
    %703 = memref.load %arg2[%c12_220] : memref<36xf32, #tpu.memory_space<smem>>
    %704 = vector.broadcast %703 : f32 to vector<16x16xf32>
    %705 = arith.mulf %704, %690 : vector<16x16xf32>
    %706 = arith.addf %668, %705 : vector<16x16xf32>
    %c13_221 = arith.constant 13 : index
    %707 = memref.load %arg2[%c13_221] : memref<36xf32, #tpu.memory_space<smem>>
    %708 = vector.broadcast %707 : f32 to vector<16x16xf32>
    %709 = arith.mulf %708, %690 : vector<16x16xf32>
    %710 = arith.addf %672, %709 : vector<16x16xf32>
    %c14_222 = arith.constant 14 : index
    %711 = memref.load %arg2[%c14_222] : memref<36xf32, #tpu.memory_space<smem>>
    %712 = vector.broadcast %711 : f32 to vector<16x16xf32>
    %713 = arith.mulf %712, %690 : vector<16x16xf32>
    %714 = arith.addf %676, %713 : vector<16x16xf32>
    %c15_223 = arith.constant 15 : index
    %715 = memref.load %arg2[%c15_223] : memref<36xf32, #tpu.memory_space<smem>>
    %716 = vector.broadcast %715 : f32 to vector<16x16xf32>
    %717 = arith.mulf %716, %690 : vector<16x16xf32>
    %718 = arith.addf %680, %717 : vector<16x16xf32>
    %c16_224 = arith.constant 16 : index
    %719 = memref.load %arg2[%c16_224] : memref<36xf32, #tpu.memory_space<smem>>
    %720 = vector.broadcast %719 : f32 to vector<16x16xf32>
    %721 = arith.mulf %720, %690 : vector<16x16xf32>
    %722 = arith.addf %684, %721 : vector<16x16xf32>
    %c17_225 = arith.constant 17 : index
    %723 = memref.load %arg2[%c17_225] : memref<36xf32, #tpu.memory_space<smem>>
    %724 = vector.broadcast %723 : f32 to vector<16x16xf32>
    %725 = arith.mulf %724, %690 : vector<16x16xf32>
    %726 = arith.addf %688, %725 : vector<16x16xf32>
    %c3_226 = arith.constant 3 : index
    %c2_227 = arith.constant 2 : index
    %c0_228 = arith.constant 0 : index
    %c0_229 = arith.constant 0 : index
    %727 = vector.load %arg1[%c3_226, %c2_227, %c0_228, %c0_229] : memref<4x4x16x16xf32, #tpu.memory_space<vmem>>, vector<1x1x16x16xf32>
    %728 = vector.shape_cast %727 : vector<1x1x16x16xf32> to vector<16x16xf32>
    %c18_230 = arith.constant 18 : index
    %729 = memref.load %arg2[%c18_230] : memref<36xf32, #tpu.memory_space<smem>>
    %730 = vector.broadcast %729 : f32 to vector<16x16xf32>
    %731 = arith.mulf %730, %728 : vector<16x16xf32>
    %732 = arith.addf %694, %731 : vector<16x16xf32>
    %c19_231 = arith.constant 19 : index
    %733 = memref.load %arg2[%c19_231] : memref<36xf32, #tpu.memory_space<smem>>
    %734 = vector.broadcast %733 : f32 to vector<16x16xf32>
    %735 = arith.mulf %734, %728 : vector<16x16xf32>
    %736 = arith.addf %698, %735 : vector<16x16xf32>
    %c20_232 = arith.constant 20 : index
    %737 = memref.load %arg2[%c20_232] : memref<36xf32, #tpu.memory_space<smem>>
    %738 = vector.broadcast %737 : f32 to vector<16x16xf32>
    %739 = arith.mulf %738, %728 : vector<16x16xf32>
    %740 = arith.addf %702, %739 : vector<16x16xf32>
    %c21_233 = arith.constant 21 : index
    %741 = memref.load %arg2[%c21_233] : memref<36xf32, #tpu.memory_space<smem>>
    %742 = vector.broadcast %741 : f32 to vector<16x16xf32>
    %743 = arith.mulf %742, %728 : vector<16x16xf32>
    %744 = arith.addf %706, %743 : vector<16x16xf32>
    %c22_234 = arith.constant 22 : index
    %745 = memref.load %arg2[%c22_234] : memref<36xf32, #tpu.memory_space<smem>>
    %746 = vector.broadcast %745 : f32 to vector<16x16xf32>
    %747 = arith.mulf %746, %728 : vector<16x16xf32>
    %748 = arith.addf %710, %747 : vector<16x16xf32>
    %c23_235 = arith.constant 23 : index
    %749 = memref.load %arg2[%c23_235] : memref<36xf32, #tpu.memory_space<smem>>
    %750 = vector.broadcast %749 : f32 to vector<16x16xf32>
    %751 = arith.mulf %750, %728 : vector<16x16xf32>
    %752 = arith.addf %714, %751 : vector<16x16xf32>
    %c24_236 = arith.constant 24 : index
    %753 = memref.load %arg2[%c24_236] : memref<36xf32, #tpu.memory_space<smem>>
    %754 = vector.broadcast %753 : f32 to vector<16x16xf32>
    %755 = arith.mulf %754, %728 : vector<16x16xf32>
    %756 = arith.addf %718, %755 : vector<16x16xf32>
    %c25_237 = arith.constant 25 : index
    %757 = memref.load %arg2[%c25_237] : memref<36xf32, #tpu.memory_space<smem>>
    %758 = vector.broadcast %757 : f32 to vector<16x16xf32>
    %759 = arith.mulf %758, %728 : vector<16x16xf32>
    %760 = arith.addf %722, %759 : vector<16x16xf32>
    %c26_238 = arith.constant 26 : index
    %761 = memref.load %arg2[%c26_238] : memref<36xf32, #tpu.memory_space<smem>>
    %762 = vector.broadcast %761 : f32 to vector<16x16xf32>
    %763 = arith.mulf %762, %728 : vector<16x16xf32>
    %764 = arith.addf %726, %763 : vector<16x16xf32>
    %c3_239 = arith.constant 3 : index
    %c3_240 = arith.constant 3 : index
    %c0_241 = arith.constant 0 : index
    %c0_242 = arith.constant 0 : index
    %765 = vector.load %arg1[%c3_239, %c3_240, %c0_241, %c0_242] : memref<4x4x16x16xf32, #tpu.memory_space<vmem>>, vector<1x1x16x16xf32>
    %766 = vector.shape_cast %765 : vector<1x1x16x16xf32> to vector<16x16xf32>
    %c27_243 = arith.constant 27 : index
    %767 = memref.load %arg2[%c27_243] : memref<36xf32, #tpu.memory_space<smem>>
    %768 = vector.broadcast %767 : f32 to vector<16x16xf32>
    %769 = arith.mulf %768, %766 : vector<16x16xf32>
    %770 = arith.addf %732, %769 : vector<16x16xf32>
    %c28_244 = arith.constant 28 : index
    %771 = memref.load %arg2[%c28_244] : memref<36xf32, #tpu.memory_space<smem>>
    %772 = vector.broadcast %771 : f32 to vector<16x16xf32>
    %773 = arith.mulf %772, %766 : vector<16x16xf32>
    %774 = arith.addf %736, %773 : vector<16x16xf32>
    %c29_245 = arith.constant 29 : index
    %775 = memref.load %arg2[%c29_245] : memref<36xf32, #tpu.memory_space<smem>>
    %776 = vector.broadcast %775 : f32 to vector<16x16xf32>
    %777 = arith.mulf %776, %766 : vector<16x16xf32>
    %778 = arith.addf %740, %777 : vector<16x16xf32>
    %c30_246 = arith.constant 30 : index
    %779 = memref.load %arg2[%c30_246] : memref<36xf32, #tpu.memory_space<smem>>
    %780 = vector.broadcast %779 : f32 to vector<16x16xf32>
    %781 = arith.mulf %780, %766 : vector<16x16xf32>
    %782 = arith.addf %744, %781 : vector<16x16xf32>
    %c31_247 = arith.constant 31 : index
    %783 = memref.load %arg2[%c31_247] : memref<36xf32, #tpu.memory_space<smem>>
    %784 = vector.broadcast %783 : f32 to vector<16x16xf32>
    %785 = arith.mulf %784, %766 : vector<16x16xf32>
    %786 = arith.addf %748, %785 : vector<16x16xf32>
    %c32_248 = arith.constant 32 : index
    %787 = memref.load %arg2[%c32_248] : memref<36xf32, #tpu.memory_space<smem>>
    %788 = vector.broadcast %787 : f32 to vector<16x16xf32>
    %789 = arith.mulf %788, %766 : vector<16x16xf32>
    %790 = arith.addf %752, %789 : vector<16x16xf32>
    %c33_249 = arith.constant 33 : index
    %791 = memref.load %arg2[%c33_249] : memref<36xf32, #tpu.memory_space<smem>>
    %792 = vector.broadcast %791 : f32 to vector<16x16xf32>
    %793 = arith.mulf %792, %766 : vector<16x16xf32>
    %794 = arith.addf %756, %793 : vector<16x16xf32>
    %c34_250 = arith.constant 34 : index
    %795 = memref.load %arg2[%c34_250] : memref<36xf32, #tpu.memory_space<smem>>
    %796 = vector.broadcast %795 : f32 to vector<16x16xf32>
    %797 = arith.mulf %796, %766 : vector<16x16xf32>
    %798 = arith.addf %760, %797 : vector<16x16xf32>
    %c35_251 = arith.constant 35 : index
    %799 = memref.load %arg2[%c35_251] : memref<36xf32, #tpu.memory_space<smem>>
    %800 = vector.broadcast %799 : f32 to vector<16x16xf32>
    %801 = arith.mulf %800, %766 : vector<16x16xf32>
    %802 = arith.addf %764, %801 : vector<16x16xf32>
    %c0_252 = arith.constant 0 : index
    %803 = memref.load %arg3[%c0_252] : memref<1xf32, #tpu.memory_space<smem>>
    %804 = vector.broadcast %803 : f32 to vector<16x16xf32>
    %cst_253 = arith.constant 0.000000e+00 : f32
    %805 = vector.broadcast %cst_253 : f32 to vector<1x16xf32>
    %806 = vector.extract_strided_slice %770 {offsets = [0, 0], sizes = [15, 16], strides = [1, 1]} : vector<16x16xf32> to vector<15x16xf32>
    %807 = tpu.concatenate %805, %806 in 0 : vector<1x16xf32>, vector<15x16xf32> -> vector<16x16xf32>
    %cst_254 = arith.constant 0.000000e+00 : f32
    %808 = vector.broadcast %cst_254 : f32 to vector<16x1xf32>
    %809 = vector.extract_strided_slice %807 {offsets = [0, 0], sizes = [16, 15], strides = [1, 1]} : vector<16x16xf32> to vector<16x15xf32>
    %810 = tpu.concatenate %808, %809 in 1 : vector<16x1xf32>, vector<16x15xf32> -> vector<16x16xf32>
    %811 = arith.addf %804, %810 : vector<16x16xf32>
    %cst_255 = arith.constant 0.000000e+00 : f32
    %812 = vector.broadcast %cst_255 : f32 to vector<1x16xf32>
    %813 = vector.extract_strided_slice %774 {offsets = [0, 0], sizes = [15, 16], strides = [1, 1]} : vector<16x16xf32> to vector<15x16xf32>
    %814 = tpu.concatenate %812, %813 in 0 : vector<1x16xf32>, vector<15x16xf32> -> vector<16x16xf32>
    %815 = arith.addf %811, %814 : vector<16x16xf32>
    %cst_256 = arith.constant 0.000000e+00 : f32
    %816 = vector.broadcast %cst_256 : f32 to vector<1x16xf32>
    %817 = vector.extract_strided_slice %778 {offsets = [0, 0], sizes = [15, 16], strides = [1, 1]} : vector<16x16xf32> to vector<15x16xf32>
    %818 = tpu.concatenate %816, %817 in 0 : vector<1x16xf32>, vector<15x16xf32> -> vector<16x16xf32>
    %819 = vector.extract_strided_slice %818 {offsets = [0, 1], sizes = [16, 15], strides = [1, 1]} : vector<16x16xf32> to vector<16x15xf32>
    %cst_257 = arith.constant 0.000000e+00 : f32
    %820 = vector.broadcast %cst_257 : f32 to vector<16x1xf32>
    %821 = tpu.concatenate %819, %820 in 1 : vector<16x15xf32>, vector<16x1xf32> -> vector<16x16xf32>
    %822 = arith.addf %815, %821 : vector<16x16xf32>
    %cst_258 = arith.constant 0.000000e+00 : f32
    %823 = vector.broadcast %cst_258 : f32 to vector<16x1xf32>
    %824 = vector.extract_strided_slice %782 {offsets = [0, 0], sizes = [16, 15], strides = [1, 1]} : vector<16x16xf32> to vector<16x15xf32>
    %825 = tpu.concatenate %823, %824 in 1 : vector<16x1xf32>, vector<16x15xf32> -> vector<16x16xf32>
    %826 = arith.addf %822, %825 : vector<16x16xf32>
    %827 = arith.addf %826, %786 : vector<16x16xf32>
    %828 = vector.extract_strided_slice %790 {offsets = [0, 1], sizes = [16, 15], strides = [1, 1]} : vector<16x16xf32> to vector<16x15xf32>
    %cst_259 = arith.constant 0.000000e+00 : f32
    %829 = vector.broadcast %cst_259 : f32 to vector<16x1xf32>
    %830 = tpu.concatenate %828, %829 in 1 : vector<16x15xf32>, vector<16x1xf32> -> vector<16x16xf32>
    %831 = arith.addf %827, %830 : vector<16x16xf32>
    %832 = vector.extract_strided_slice %794 {offsets = [1, 0], sizes = [15, 16], strides = [1, 1]} : vector<16x16xf32> to vector<15x16xf32>
    %cst_260 = arith.constant 0.000000e+00 : f32
    %833 = vector.broadcast %cst_260 : f32 to vector<1x16xf32>
    %834 = tpu.concatenate %832, %833 in 0 : vector<15x16xf32>, vector<1x16xf32> -> vector<16x16xf32>
    %cst_261 = arith.constant 0.000000e+00 : f32
    %835 = vector.broadcast %cst_261 : f32 to vector<16x1xf32>
    %836 = vector.extract_strided_slice %834 {offsets = [0, 0], sizes = [16, 15], strides = [1, 1]} : vector<16x16xf32> to vector<16x15xf32>
    %837 = tpu.concatenate %835, %836 in 1 : vector<16x1xf32>, vector<16x15xf32> -> vector<16x16xf32>
    %838 = arith.addf %831, %837 : vector<16x16xf32>
    %839 = vector.extract_strided_slice %798 {offsets = [1, 0], sizes = [15, 16], strides = [1, 1]} : vector<16x16xf32> to vector<15x16xf32>
    %cst_262 = arith.constant 0.000000e+00 : f32
    %840 = vector.broadcast %cst_262 : f32 to vector<1x16xf32>
    %841 = tpu.concatenate %839, %840 in 0 : vector<15x16xf32>, vector<1x16xf32> -> vector<16x16xf32>
    %842 = arith.addf %838, %841 : vector<16x16xf32>
    %843 = vector.extract_strided_slice %802 {offsets = [1, 0], sizes = [15, 16], strides = [1, 1]} : vector<16x16xf32> to vector<15x16xf32>
    %cst_263 = arith.constant 0.000000e+00 : f32
    %844 = vector.broadcast %cst_263 : f32 to vector<1x16xf32>
    %845 = tpu.concatenate %843, %844 in 0 : vector<15x16xf32>, vector<1x16xf32> -> vector<16x16xf32>
    %846 = vector.extract_strided_slice %845 {offsets = [0, 1], sizes = [16, 15], strides = [1, 1]} : vector<16x16xf32> to vector<16x15xf32>
    %cst_264 = arith.constant 0.000000e+00 : f32
    %847 = vector.broadcast %cst_264 : f32 to vector<16x1xf32>
    %848 = tpu.concatenate %846, %847 in 1 : vector<16x15xf32>, vector<16x1xf32> -> vector<16x16xf32>
    %849 = arith.addf %842, %848 : vector<16x16xf32>
    %cst_265 = arith.constant 0.000000e+00 : f32
    %850 = vector.broadcast %cst_265 : f32 to vector<16x16xf32>
    %851 = arith.subf %850, %849 : vector<16x16xf32>
    %852 = math.exp %851 : vector<16x16xf32>
    %cst_266 = arith.constant 1.000000e+00 : f32
    %853 = vector.broadcast %cst_266 : f32 to vector<16x16xf32>
    %854 = arith.addf %853, %852 : vector<16x16xf32>
    %855 = tpu.reciprocal %854 {approx = true} : vector<16x16xf32> -> vector<16x16xf32>
    %856 = tpu.concatenate %213, %427, %641, %855 in 1 : vector<16x16xf32>, vector<16x16xf32>, vector<16x16xf32>, vector<16x16xf32> -> vector<16x64xf32>
    %c0_267 = arith.constant 0 : index
    %c0_268 = arith.constant 0 : index
    %857 = vector.load %arg4[%c0_267, %c0_268] : memref<32x16xf32, #tpu.memory_space<vmem>>, vector<32x16xf32>
    %cst_269 = arith.constant dense<0.000000e+00> : vector<32x64xf32>
    %858 = tpu.matmul %857, %856, %cst_269 {dimension_numbers = #tpu.dot_dimension_numbers<[1], [0], [0], [1], [0, 0, 1, 1], [], []>} : vector<32x16xf32>, vector<16x64xf32>, vector<32x64xf32> -> vector<32x64xf32>
    %c0_270 = arith.constant 0 : index
    %c0_271 = arith.constant 0 : index
    %859 = vector.load %arg5[%c0_270, %c0_271] : memref<64x128xf32, #tpu.memory_space<vmem>>, vector<64x128xf32>
    %cst_272 = arith.constant dense<0.000000e+00> : vector<32x128xf32>
    %860 = tpu.matmul %858, %859, %cst_272 {dimension_numbers = #tpu.dot_dimension_numbers<[1], [0], [0], [1], [0, 0, 1, 1], [], []>} : vector<32x64xf32>, vector<64x128xf32>, vector<32x128xf32> -> vector<32x128xf32>
    %c0_273 = arith.constant 0 : index
    %c0_274 = arith.constant 0 : index
    %c0_275 = arith.constant 0 : index
    %861 = vector.load %arg6[%c0_273, %c0_274, %c0_275] : memref<1x32x128xf32, #tpu.memory_space<vmem>>, vector<1x32x128xf32>
    %862 = vector.shape_cast %861 : vector<1x32x128xf32> to vector<32x128xf32>
    %863 = vector.shape_cast %860 : vector<32x128xf32> to vector<1x32x128xf32>
    tpu.vector_store %arg6[%c0_273, %c0_274, %c0_275], %863 {strides = array<i32>} : memref<1x32x128xf32, #tpu.memory_space<vmem>>, vector<1x32x128xf32>,
    return
  }
  func.func @transform_0(%arg0: i32) -> (i32, i32, i32, i32) {
    %c0_i32 = arith.constant 0 : i32
    %c0_i32_0 = arith.constant 0 : i32
    %c0_i32_1 = arith.constant 0 : i32
    %c0_i32_2 = arith.constant 0 : i32
    return %arg0, %c0_i32, %c0_i32_0, %c0_i32_1 : i32, i32, i32, i32
  }
  func.func @transform_1(%arg0: i32) -> i32 {
    %c0_i32 = arith.constant 0 : i32
    %c0_i32_0 = arith.constant 0 : i32
    return %c0_i32 : i32
  }
  func.func @transform_2(%arg0: i32) -> i32 {
    %c0_i32 = arith.constant 0 : i32
    %c0_i32_0 = arith.constant 0 : i32
    return %c0_i32 : i32
  }
  func.func @transform_3(%arg0: i32) -> (i32, i32) {
    %c0_i32 = arith.constant 0 : i32
    %c0_i32_0 = arith.constant 0 : i32
    %c0_i32_1 = arith.constant 0 : i32
    return %c0_i32, %c0_i32_0 : i32, i32
  }
  func.func @transform_4(%arg0: i32) -> (i32, i32) {
    %c0_i32 = arith.constant 0 : i32
    %c0_i32_0 = arith.constant 0 : i32
    %c0_i32_1 = arith.constant 0 : i32
    return %c0_i32, %c0_i32_0 : i32, i32
  }
  func.func @transform_5(%arg0: i32) -> (i32, i32, i32) {
    %c0_i32 = arith.constant 0 : i32
    %c0_i32_0 = arith.constant 0 : i32
    %c0_i32_1 = arith.constant 0 : i32
    return %arg0, %c0_i32, %c0_i32_0 : i32, i32, i32
  }
}

</mosaic_0001>

<llo_original>
// kernel: tpu_custom_call.1
$region0: #{tpu_custom_call.1}
  #allocation0 [shape = 'u32[]', space=smem, size = 0x4, offset = 0x4, fixed_abs, tag = 'smem constant byte address 0x4 - core index']
  #allocation1 [shape = 'u32[144,128]{1,0:T(1,128)}', space=vmem, size = 0x12000, scoped, tag = 'internal scratch']
  #allocation2 [shape = 'f32[1]{0:T(128)S(6)}', space=smem, size = 0x200, scoped, tag = 'scoped memory for tpu_custom_call.1']
  %s0 = inlined_call_operand.hbm [shape: f32[4,4,16,16], index: 0, kind: input, shape index: {}]
  %s1 = inlined_call_operand.vmem [shape: f32[36], index: 1, kind: input, shape index: {}]
  %s2 = inlined_call_operand.<no memory space> [shape: f32[1], index: 2, kind: input, shape index: {}]
  %s3 = inlined_call_operand.vmem [shape: f32[32,16], index: 3, kind: input, shape index: {}]
  %s4 = inlined_call_operand.hbm [shape: f32[64,128], index: 4, kind: input, shape index: {}]
  %s5 = inlined_call_operand.hbm [shape: f32[1,32,128], index: 5, kind: output, shape index: {}]
  %s6 = sld [smem:[#allocation0]]
  $region42: #{tpu_custom_call.1} parent=0
    _
  %s8 = ssub.s32 1, %s6
  %s9 = scalar_select 0, %s8, %s6
  %10 = sst [smem:[#allocation2]] %s2
  $region1: #{tpu_custom_call.1} parent=0
    #allocation3 [shape = 'u8[131072]{0}', space=vmem, size = 0x20000, scoped, tag = 'input window, operand 0, single buffered']
    #allocation4 [shape = 's32[1]{0}', space=sflag, size = 0x4, scoped, tag = 'scoped memory for tpu_custom_call.1']
    #allocation5 [shape = 's32[1]{0}', space=sflag, size = 0x4, scoped, tag = 'scoped memory for tpu_custom_call.1']
    #allocation6 [shape = 's32[1]{0}', space=sflag, size = 0x4, scoped, tag = 'scoped memory for tpu_custom_call.1']
    #allocation7 [shape = 'u8[512]{0}', space=smem, size = 0x200, scoped, tag = 'input window, operand 1, single buffered']
    #allocation8 [shape = 'u8[32768]{0}', space=vmem, size = 0x8000, scoped, tag = 'input window, operand 4, single buffered']
    #allocation9 [shape = 's32[1]{0}', space=sflag, size = 0x4, scoped, tag = 'scoped memory for tpu_custom_call.1']
    #allocation10 [shape = 'u8[16384]{0}', space=vmem, size = 0x4000, scoped, tag = 'output window, operand 0, single buffered']
    %11 = vsyncpa [#allocation4], 0
    %12 = vsyncpa [#allocation6], 0
    %13 = vsyncpa [#allocation9], 0
    %14 = vsyncpa [#allocation5], 0
    // Predicated region
    $region2: #{tpu_custom_call.1} parent=1 // pred_check
      _
    $region3: #{tpu_custom_call.1} parent=1 // pred_check_branch
      %16 = sbr.rel (0) target = $region5
    $region4: #{tpu_custom_call.1} parent=1 // pred_region
      %s18 = ssub.s32 4096, 4096
      %19 = vsyncadd [#allocation4], %s18
      %s20 = sshll.u32 [#allocation3], 4
      %s21 = int_to_ptr.vmem [resolvable:$true] %s20
      %26 = dma.hbm_to_vmem [thread:$0]  %s0, 4096, %s21, [#allocation4], 128, 128, 8
    $region5: #{tpu_custom_call.1} parent=1 // pred_fallthru
      _
    // Predicated region
    $region6: #{tpu_custom_call.1} parent=1 // pred_check
      _
    $region7: #{tpu_custom_call.1} parent=1 // pred_check_branch
      %28 = sbr.rel (0) target = $region9
    $region8: #{tpu_custom_call.1} parent=1 // pred_region
      %s30 = ssub.s32 16, 16
      %31 = vsyncadd [#allocation6], %s30
      %s33 = sshll.u32 %s1, 4
      %s34 = int_to_ptr.vmem [resolvable:$true] %s33
      %36 = dma.vmem_to_smem %s34, 16, [#allocation7], [#allocation6]
    $region9: #{tpu_custom_call.1} parent=1 // pred_fallthru
      _
    // Predicated region
    $region10: #{tpu_custom_call.1} parent=1 // pred_check
      _
    $region11: #{tpu_custom_call.1} parent=1 // pred_check_branch
      %38 = sbr.rel (0) target = $region13
    $region12: #{tpu_custom_call.1} parent=1 // pred_region
      _
    $region13: #{tpu_custom_call.1} parent=1 // pred_fallthru
      _
    // Predicated region
    $region14: #{tpu_custom_call.1} parent=1 // pred_check
      _
    $region15: #{tpu_custom_call.1} parent=1 // pred_check_branch
      %40 = sbr.rel (0) target = $region17
    $region16: #{tpu_custom_call.1} parent=1 // pred_region
      _
    $region17: #{tpu_custom_call.1} parent=1 // pred_fallthru
      _
    // Predicated region
    $region18: #{tpu_custom_call.1} parent=1 // pred_check
      _
    $region19: #{tpu_custom_call.1} parent=1 // pred_check_branch
      %42 = sbr.rel (0) target = $region21
    $region20: #{tpu_custom_call.1} parent=1 // pred_region
      %s44 = ssub.s32 1024, 1024
      %45 = vsyncadd [#allocation9], %s44
      %s46 = sshll.u32 [#allocation8], 4
      %s47 = int_to_ptr.vmem [resolvable:$true] %s46
      %52 = dma.hbm_to_vmem [thread:$0]  %s4, 1024, %s47, [#allocation9], 128, 128, 8
    $region21: #{tpu_custom_call.1} parent=1 // pred_fallthru
      _
    // Predicated region
    $region22: #{tpu_custom_call.1} parent=1 // pred_check
      _
    $region23: #{tpu_custom_call.1} parent=1 // pred_check_branch
      %54 = sbr.rel (0) target = $region25
    $region24: #{tpu_custom_call.1} parent=1 // pred_region
      %55 = dma.done [#allocation4], 4096
    $region25: #{tpu_custom_call.1} parent=1 // pred_fallthru
      _
    // Predicated region
    $region26: #{tpu_custom_call.1} parent=1 // pred_check
      _
    $region27: #{tpu_custom_call.1} parent=1 // pred_check_branch
      %57 = sbr.rel (0) target = $region29
    $region28: #{tpu_custom_call.1} parent=1 // pred_region
      %58 = dma.done [#allocation6], 16
    $region29: #{tpu_custom_call.1} parent=1 // pred_fallthru
      _
    // Predicated region
    $region30: #{tpu_custom_call.1} parent=1 // pred_check
      _
    $region31: #{tpu_custom_call.1} parent=1 // pred_check_branch
      %60 = sbr.rel (0) target = $region33
    $region32: #{tpu_custom_call.1} parent=1 // pred_region
      %61 = dma.done [#allocation9], 1024
    $region33: #{tpu_custom_call.1} parent=1 // pred_fallthru
      _
    %62 = sfence
    %v63 = vld [vmem:[#allocation3] sm:$0xff]
    %v64 = vld [vmem:[#allocation3 + $0x8] sm:$0xff]
    %s65 = sld [smem:[#allocation7]]
    %v66 = vstv %s65
    %v67 = vmul.f32 %v66, %v63
    %v68 = vmul.f32 %v66, %v64
    %v69 = vadd.f32 %v67, 0.0
    %v70 = vadd.f32 %v68, 0.0
    %s71 = sld [smem:[#allocation7 + $0x1]]
    %v72 = vstv %s71
    %v73 = vmul.f32 %v72, %v63
    %v74 = vmul.f32 %v72, %v64
    %v75 = vadd.f32 %v73, 0.0
    %v76 = vadd.f32 %v74, 0.0
    %s77 = sld [smem:[#allocation7 + $0x2]]
    %v78 = vstv %s77
    %v79 = vmul.f32 %v78, %v63
    %v80 = vmul.f32 %v78, %v64
    %v81 = vadd.f32 %v79, 0.0
    %v82 = vadd.f32 %v80, 0.0
    %s83 = sld [smem:[#allocation7 + $0x3]]
    %v84 = vstv %s83
    %v85 = vmul.f32 %v84, %v63
    %v86 = vmul.f32 %v84, %v64
    %v87 = vadd.f32 %v85, 0.0
    %v88 = vadd.f32 %v86, 0.0
    %s89 = sld [smem:[#allocation7 + $0x4]]
    %v90 = vstv %s89
    %v91 = vmul.f32 %v90, %v63
    %v92 = vmul.f32 %v90, %v64
    %v93 = vadd.f32 %v91, 0.0
    %v94 = vadd.f32 %v92, 0.0
    %s95 = sld [smem:[#allocation7 + $0x5]]
    %v96 = vstv %s95
    %v97 = vmul.f32 %v96, %v63
    %v98 = vmul.f32 %v96, %v64
    %v99 = vadd.f32 %v97, 0.0
    %v100 = vadd.f32 %v98, 0.0
    %s101 = sld [smem:[#allocation7 + $0x6]]
    %v102 = vstv %s101
    %v103 = vmul.f32 %v102, %v63
    %v104 = vmul.f32 %v102, %v64
    %v105 = vadd.f32 %v103, 0.0
    %v106 = vadd.f32 %v104, 0.0
    %s107 = sld [smem:[#allocation7 + $0x7]]
    %v108 = vstv %s107
    %v109 = vmul.f32 %v108, %v63
    %v110 = vmul.f32 %v108, %v64
    %v111 = vadd.f32 %v109, 0.0
    %v112 = vadd.f32 %v110, 0.0
    %s113 = sld [smem:[#allocation7 + $0x8]]
    %v114 = vstv %s113
    %v115 = vmul.f32 %v114, %v63
    %v116 = vmul.f32 %v114, %v64
    %v117 = vadd.f32 %v115, 0.0
    %v118 = vadd.f32 %v116, 0.0
    %s119 = scalar_lea.vmem [#allocation3], 16
    %v120 = vld [vmem:[%s119] sm:$0xff]
    %v121 = vld [vmem:[%s119 + $0x8] sm:$0xff]
    %s122 = sld [smem:[#allocation7 + $0x9]]
    %v123 = vstv %s122
    %v124 = vmul.f32 %v123, %v120
    %v125 = vmul.f32 %v123, %v121
    %v126 = vadd.f32 %v69, %v124
    %v127 = vadd.f32 %v70, %v125
    %s128 = sld [smem:[#allocation7 + $0xa]]
    %v129 = vstv %s128
    %v130 = vmul.f32 %v129, %v120
    %v131 = vmul.f32 %v129, %v121
    %v132 = vadd.f32 %v75, %v130
    %v133 = vadd.f32 %v76, %v131
    %s134 = sld [smem:[#allocation7 + $0xb]]
    %v135 = vstv %s134
    %v136 = vmul.f32 %v135, %v120
    %v137 = vmul.f32 %v135, %v121
    %v138 = vadd.f32 %v81, %v136
    %v139 = vadd.f32 %v82, %v137
    %s140 = sld [smem:[#allocation7 + $0xc]]
    %v141 = vstv %s140
    %v142 = vmul.f32 %v141, %v120
    %v143 = vmul.f32 %v141, %v121
    %v144 = vadd.f32 %v87, %v142
    %v145 = vadd.f32 %v88, %v143
    %s146 = sld [smem:[#allocation7 + $0xd]]
    %v147 = vstv %s146
    %v148 = vmul.f32 %v147, %v120
    %v149 = vmul.f32 %v147, %v121
    %v150 = vadd.f32 %v93, %v148
    %v151 = vadd.f32 %v94, %v149
    %s152 = sld [smem:[#allocation7 + $0xe]]
    %v153 = vstv %s152
    %v154 = vmul.f32 %v153, %v120
    %v155 = vmul.f32 %v153, %v121
    %v156 = vadd.f32 %v99, %v154
    %v157 = vadd.f32 %v100, %v155
    %s158 = sld [smem:[#allocation7 + $0xf]]
    %v159 = vstv %s158
    %v160 = vmul.f32 %v159, %v120
    %v161 = vmul.f32 %v159, %v121
    %v162 = vadd.f32 %v105, %v160
    %v163 = vadd.f32 %v106, %v161
    %s164 = sld [smem:[#allocation7 + $0x10]]
    %v165 = vstv %s164
    %v166 = vmul.f32 %v165, %v120
    %v167 = vmul.f32 %v165, %v121
    %v168 = vadd.f32 %v111, %v166
    %v169 = vadd.f32 %v112, %v167
    %s170 = sld [smem:[#allocation7 + $0x11]]
    %v171 = vstv %s170
    %v172 = vmul.f32 %v171, %v120
    %v173 = vmul.f32 %v171, %v121
    %v174 = vadd.f32 %v117, %v172
    %v175 = vadd.f32 %v118, %v173
    %s176 = scalar_lea.vmem [#allocation3], 32
    %v177 = vld [vmem:[%s176] sm:$0xff]
    %v178 = vld [vmem:[%s176 + $0x8] sm:$0xff]
    %s179 = sld [smem:[#allocation7 + $0x12]]
    %v180 = vstv %s179
    %v181 = vmul.f32 %v180, %v177
    %v182 = vmul.f32 %v180, %v178
    %v183 = vadd.f32 %v126, %v181
    %v184 = vadd.f32 %v127, %v182
    %s185 = sld [smem:[#allocation7 + $0x13]]
    %v186 = vstv %s185
    %v187 = vmul.f32 %v186, %v177
    %v188 = vmul.f32 %v186, %v178
    %v189 = vadd.f32 %v132, %v187
    %v190 = vadd.f32 %v133, %v188
    %s191 = sld [smem:[#allocation7 + $0x14]]
    %v192 = vstv %s191
    %v193 = vmul.f32 %v192, %v177
    %v194 = vmul.f32 %v192, %v178
    %v195 = vadd.f32 %v138, %v193
    %v196 = vadd.f32 %v139, %v194
    %s197 = sld [smem:[#allocation7 + $0x15]]
    %v198 = vstv %s197
    %v199 = vmul.f32 %v198, %v177
    %v200 = vmul.f32 %v198, %v178
    %v201 = vadd.f32 %v144, %v199
    %v202 = vadd.f32 %v145, %v200
    %s203 = sld [smem:[#allocation7 + $0x16]]
    %v204 = vstv %s203
    %v205 = vmul.f32 %v204, %v177
    %v206 = vmul.f32 %v204, %v178
    %v207 = vadd.f32 %v150, %v205
    %v208 = vadd.f32 %v151, %v206
    %s209 = sld [smem:[#allocation7 + $0x17]]
    %v210 = vstv %s209
    %v211 = vmul.f32 %v210, %v177
    %v212 = vmul.f32 %v210, %v178
    %v213 = vadd.f32 %v156, %v211
    %v214 = vadd.f32 %v157, %v212
    %s215 = sld [smem:[#allocation7 + $0x18]]
    %v216 = vstv %s215
    %v217 = vmul.f32 %v216, %v177
    %v218 = vmul.f32 %v216, %v178
    %v219 = vadd.f32 %v162, %v217
    %v220 = vadd.f32 %v163, %v218
    %s221 = sld [smem:[#allocation7 + $0x19]]
    %v222 = vstv %s221
    %v223 = vmul.f32 %v222, %v177
    %v224 = vmul.f32 %v222, %v178
    %v225 = vadd.f32 %v168, %v223
    %v226 = vadd.f32 %v169, %v224
    %s227 = sld [smem:[#allocation7 + $0x1a]]
    %v228 = vstv %s227
    %v229 = vmul.f32 %v228, %v177
    %v230 = vmul.f32 %v228, %v178
    %v231 = vadd.f32 %v174, %v229
    %v232 = vadd.f32 %v175, %v230
    %s233 = scalar_lea.vmem [#allocation3], 48
    %v234 = vld [vmem:[%s233] sm:$0xff]
    %v235 = vld [vmem:[%s233 + $0x8] sm:$0xff]
    %s236 = sld [smem:[#allocation7 + $0x1b]]
    %v237 = vstv %s236
    %v238 = vmul.f32 %v237, %v234
    %v239 = vmul.f32 %v237, %v235
    %v240 = vadd.f32 %v183, %v238
    %v241 = vadd.f32 %v184, %v239
    %s242 = sld [smem:[#allocation7 + $0x1c]]
    %v243 = vstv %s242
    %v244 = vmul.f32 %v243, %v234
    %v245 = vmul.f32 %v243, %v235
    %v246 = vadd.f32 %v189, %v244
    %v247 = vadd.f32 %v190, %v245
    %s248 = sld [smem:[#allocation7 + $0x1d]]
    %v249 = vstv %s248
    %v250 = vmul.f32 %v249, %v234
    %v251 = vmul.f32 %v249, %v235
    %v252 = vadd.f32 %v195, %v250
    %v253 = vadd.f32 %v196, %v251
    %s254 = sld [smem:[#allocation7 + $0x1e]]
    %v255 = vstv %s254
    %v256 = vmul.f32 %v255, %v234
    %v257 = vmul.f32 %v255, %v235
    %v258 = vadd.f32 %v201, %v256
    %v259 = vadd.f32 %v202, %v257
    %s260 = sld [smem:[#allocation7 + $0x1f]]
    %v261 = vstv %s260
    %v262 = vmul.f32 %v261, %v234
    %v263 = vmul.f32 %v261, %v235
    %v264 = vadd.f32 %v207, %v262
    %v265 = vadd.f32 %v208, %v263
    %s266 = sld [smem:[#allocation7 + $0x20]]
    %v267 = vstv %s266
    %v268 = vmul.f32 %v267, %v234
    %v269 = vmul.f32 %v267, %v235
    %v270 = vadd.f32 %v213, %v268
    %v271 = vadd.f32 %v214, %v269
    %s272 = sld [smem:[#allocation7 + $0x21]]
    %v273 = vstv %s272
    %v274 = vmul.f32 %v273, %v234
    %v275 = vmul.f32 %v273, %v235
    %v276 = vadd.f32 %v219, %v274
    %v277 = vadd.f32 %v220, %v275
    %s278 = sld [smem:[#allocation7 + $0x22]]
    %v279 = vstv %s278
    %v280 = vmul.f32 %v279, %v234
    %v281 = vmul.f32 %v279, %v235
    %v282 = vadd.f32 %v225, %v280
    %v283 = vadd.f32 %v226, %v281
    %s284 = sld [smem:[#allocation7 + $0x23]]
    %v285 = vstv %s284
    %v286 = vmul.f32 %v285, %v234
    %v287 = vmul.f32 %v285, %v235
    %v288 = vadd.f32 %v231, %v286
    %v289 = vadd.f32 %v232, %v287
    %s290 = sld [smem:[#allocation2]]
    %v291 = vstv %s290
    %vm294 = vcmask 1040384
    %v295 = vrot.slane %v240, 7
    %v296 = vrot.slane %v241, 7
    %v297 = vsel %vm294, %v295, %v296
    %v299 = vsel %vm294, 0.0, %v295
    %301 = vrot.lane.b32.xlu0 %v299, 1
    %v302 = vpop.permute.xlu0 %301
    %303 = vrot.lane.b32.xlu0 %v297, 1
    %v304 = vpop.permute.xlu0 %303
    %vm307 = vcmask 7168
    %v308 = vsel %vm307, 0.0, %v302
    %v309 = vsel %vm307, 0.0, %v304
    %v310 = vadd.f32 %v291, %v308
    %v311 = vadd.f32 %v291, %v309
    %v314 = vrot.slane %v246, 7
    %v315 = vrot.slane %v247, 7
    %v316 = vsel %vm294, %v314, %v315
    %v319 = vsel %vm294, 0.0, %v314
    %v320 = vadd.f32 %v310, %v319
    %v321 = vadd.f32 %v311, %v316
    %v324 = vrot.slane %v252, 7
    %v325 = vrot.slane %v253, 7
    %v326 = vsel %vm294, %v324, %v325
    %v328 = vsel %vm294, 0.0, %v324
    %330 = vrot.lane.b32.xlu0 %v328, 127
    %v331 = vpop.permute.xlu0 %330
    %332 = vrot.lane.b32.xlu0 %v326, 127
    %v333 = vpop.permute.xlu0 %332
    %vm336 = vcmask 121856
    %v337 = vsel %vm336, %v331, 0.0
    %v338 = vsel %vm336, %v333, 0.0
    %v339 = vadd.f32 %v320, %v337
    %v340 = vadd.f32 %v321, %v338
    %343 = vrot.lane.b32.xlu0 %v258, 1
    %v344 = vpop.permute.xlu0 %343
    %345 = vrot.lane.b32.xlu0 %v259, 1
    %v346 = vpop.permute.xlu0 %345
    %v349 = vsel %vm307, 0.0, %v344
    %v350 = vsel %vm307, 0.0, %v346
    %v351 = vadd.f32 %v339, %v349
    %v352 = vadd.f32 %v340, %v350
    %v353 = vadd.f32 %v351, %v264
    %v354 = vadd.f32 %v352, %v265
    %357 = vrot.lane.b32.xlu0 %v270, 127
    %v358 = vpop.permute.xlu0 %357
    %359 = vrot.lane.b32.xlu0 %v271, 127
    %v360 = vpop.permute.xlu0 %359
    %v363 = vsel %vm336, %v358, 0.0
    %v364 = vsel %vm336, %v360, 0.0
    %v365 = vadd.f32 %v353, %v363
    %v366 = vadd.f32 %v354, %v364
    %vm369 = vcmask 1046528
    %v370 = vrot.slane %v276, 1
    %v371 = vrot.slane %v277, 1
    %v372 = vsel %vm369, %v370, %v371
    %v374 = vsel %vm369, %v371, 0.0
    %376 = vrot.lane.b32.xlu0 %v372, 1
    %v377 = vpop.permute.xlu0 %376
    %378 = vrot.lane.b32.xlu0 %v374, 1
    %v379 = vpop.permute.xlu0 %378
    %v382 = vsel %vm307, 0.0, %v377
    %v383 = vsel %vm307, 0.0, %v379
    %v384 = vadd.f32 %v365, %v382
    %v385 = vadd.f32 %v366, %v383
    %v388 = vrot.slane %v282, 1
    %v389 = vrot.slane %v283, 1
    %v390 = vsel %vm369, %v388, %v389
    %v393 = vsel %vm369, %v389, 0.0
    %v394 = vadd.f32 %v384, %v390
    %v395 = vadd.f32 %v385, %v393
    %v398 = vrot.slane %v288, 1
    %v399 = vrot.slane %v289, 1
    %v400 = vsel %vm369, %v398, %v399
    %v402 = vsel %vm369, %v399, 0.0
    %404 = vrot.lane.b32.xlu0 %v400, 127
    %v405 = vpop.permute.xlu0 %404
    %406 = vrot.lane.b32.xlu0 %v402, 127
    %v407 = vpop.permute.xlu0 %406
    %v410 = vsel %vm336, %v405, 0.0
    %v411 = vsel %vm336, %v407, 0.0
    %v412 = vadd.f32 %v394, %v410
    %v413 = vadd.f32 %v395, %v411
    %v414 = vsub.f32 0.0, %v412
    %v415 = vsub.f32 0.0, %v413
    %v416 = vmul.f32 %v414, 1.442695
    %v417 = vpow.pop %v416
    %v418 = vmul.f32 %v415, 1.442695
    %v419 = vpow.pop %v418
    %v420 = vadd.f32 %v417, 1.0
    %v421 = vadd.f32 %v419, 1.0
    %v422 = vrcp.pop %v420
    %v423 = vrcp.pop %v421
    %s424 = scalar_lea.vmem [#allocation3], 64
    %v425 = vld [vmem:[%s424] sm:$0xff]
    %v426 = vld [vmem:[%s424 + $0x8] sm:$0xff]
    %v427 = vmul.f32 %v66, %v425
    %v428 = vmul.f32 %v66, %v426
    %v429 = vadd.f32 %v427, 0.0
    %v430 = vadd.f32 %v428, 0.0
    %v431 = vmul.f32 %v72, %v425
    %v432 = vmul.f32 %v72, %v426
    %v433 = vadd.f32 %v431, 0.0
    %v434 = vadd.f32 %v432, 0.0
    %v435 = vmul.f32 %v78, %v425
    %v436 = vmul.f32 %v78, %v426
    %v437 = vadd.f32 %v435, 0.0
    %v438 = vadd.f32 %v436, 0.0
    %v439 = vmul.f32 %v84, %v425
    %v440 = vmul.f32 %v84, %v426
    %v441 = vadd.f32 %v439, 0.0
    %v442 = vadd.f32 %v440, 0.0
    %v443 = vmul.f32 %v90, %v425
    %v444 = vmul.f32 %v90, %v426
    %v445 = vadd.f32 %v443, 0.0
    %v446 = vadd.f32 %v444, 0.0
    %v447 = vmul.f32 %v96, %v425
    %v448 = vmul.f32 %v96, %v426
    %v449 = vadd.f32 %v447, 0.0
    %v450 = vadd.f32 %v448, 0.0
    %v451 = vmul.f32 %v102, %v425
    %v452 = vmul.f32 %v102, %v426
    %v453 = vadd.f32 %v451, 0.0
    %v454 = vadd.f32 %v452, 0.0
    %v455 = vmul.f32 %v108, %v425
    %v456 = vmul.f32 %v108, %v426
    %v457 = vadd.f32 %v455, 0.0
    %v458 = vadd.f32 %v456, 0.0
    %v459 = vmul.f32 %v114, %v425
    %v460 = vmul.f32 %v114, %v426
    %v461 = vadd.f32 %v459, 0.0
    %v462 = vadd.f32 %v460, 0.0
    %s463 = scalar_lea.vmem [#allocation3], 80
    %v464 = vld [vmem:[%s463] sm:$0xff]
    %v465 = vld [vmem:[%s463 + $0x8] sm:$0xff]
    %v466 = vmul.f32 %v123, %v464
    %v467 = vmul.f32 %v123, %v465
    %v468 = vadd.f32 %v429, %v466
    %v469 = vadd.f32 %v430, %v467
    %v470 = vmul.f32 %v129, %v464
    %v471 = vmul.f32 %v129, %v465
    %v472 = vadd.f32 %v433, %v470
    %v473 = vadd.f32 %v434, %v471
    %v474 = vmul.f32 %v135, %v464
    %v475 = vmul.f32 %v135, %v465
    %v476 = vadd.f32 %v437, %v474
    %v477 = vadd.f32 %v438, %v475
    %v478 = vmul.f32 %v141, %v464
    %v479 = vmul.f32 %v141, %v465
    %v480 = vadd.f32 %v441, %v478
    %v481 = vadd.f32 %v442, %v479
    %v482 = vmul.f32 %v147, %v464
    %v483 = vmul.f32 %v147, %v465
    %v484 = vadd.f32 %v445, %v482
    %v485 = vadd.f32 %v446, %v483
    %v486 = vmul.f32 %v153, %v464
    %v487 = vmul.f32 %v153, %v465
    %v488 = vadd.f32 %v449, %v486
    %v489 = vadd.f32 %v450, %v487
    %v490 = vmul.f32 %v159, %v464
    %v491 = vmul.f32 %v159, %v465
    %v492 = vadd.f32 %v453, %v490
    %v493 = vadd.f32 %v454, %v491
    %v494 = vmul.f32 %v165, %v464
    %v495 = vmul.f32 %v165, %v465
    %v496 = vadd.f32 %v457, %v494
    %v497 = vadd.f32 %v458, %v495
    %v498 = vmul.f32 %v171, %v464
    %v499 = vmul.f32 %v171, %v465
    %v500 = vadd.f32 %v461, %v498
    %v501 = vadd.f32 %v462, %v499
    %s502 = scalar_lea.vmem [#allocation3], 96
    %v503 = vld [vmem:[%s502] sm:$0xff]
    %v504 = vld [vmem:[%s502 + $0x8] sm:$0xff]
    %v505 = vmul.f32 %v180, %v503
    %v506 = vmul.f32 %v180, %v504
    %v507 = vadd.f32 %v468, %v505
    %v508 = vadd.f32 %v469, %v506
    %v509 = vmul.f32 %v186, %v503
    %v510 = vmul.f32 %v186, %v504
    %v511 = vadd.f32 %v472, %v509
    %v512 = vadd.f32 %v473, %v510
    %v513 = vmul.f32 %v192, %v503
    %v514 = vmul.f32 %v192, %v504
    %v515 = vadd.f32 %v476, %v513
    %v516 = vadd.f32 %v477, %v514
    %v517 = vmul.f32 %v198, %v503
    %v518 = vmul.f32 %v198, %v504
    %v519 = vadd.f32 %v480, %v517
    %v520 = vadd.f32 %v481, %v518
    %v521 = vmul.f32 %v204, %v503
    %v522 = vmul.f32 %v204, %v504
    %v523 = vadd.f32 %v484, %v521
    %v524 = vadd.f32 %v485, %v522
    %v525 = vmul.f32 %v210, %v503
    %v526 = vmul.f32 %v210, %v504
    %v527 = vadd.f32 %v488, %v525
    %v528 = vadd.f32 %v489, %v526
    %v529 = vmul.f32 %v216, %v503
    %v530 = vmul.f32 %v216, %v504
    %v531 = vadd.f32 %v492, %v529
    %v532 = vadd.f32 %v493, %v530
    %v533 = vmul.f32 %v222, %v503
    %v534 = vmul.f32 %v222, %v504
    %v535 = vadd.f32 %v496, %v533
    %v536 = vadd.f32 %v497, %v534
    %v537 = vmul.f32 %v228, %v503
    %v538 = vmul.f32 %v228, %v504
    %v539 = vadd.f32 %v500, %v537
    %v540 = vadd.f32 %v501, %v538
    %s541 = scalar_lea.vmem [#allocation3], 112
    %v542 = vld [vmem:[%s541] sm:$0xff]
    %v543 = vld [vmem:[%s541 + $0x8] sm:$0xff]
    %v544 = vmul.f32 %v237, %v542
    %v545 = vmul.f32 %v237, %v543
    %v546 = vadd.f32 %v507, %v544
    %v547 = vadd.f32 %v508, %v545
    %v548 = vmul.f32 %v243, %v542
    %v549 = vmul.f32 %v243, %v543
    %v550 = vadd.f32 %v511, %v548
    %v551 = vadd.f32 %v512, %v549
    %v552 = vmul.f32 %v249, %v542
    %v553 = vmul.f32 %v249, %v543
    %v554 = vadd.f32 %v515, %v552
    %v555 = vadd.f32 %v516, %v553
    %v556 = vmul.f32 %v255, %v542
    %v557 = vmul.f32 %v255, %v543
    %v558 = vadd.f32 %v519, %v556
    %v559 = vadd.f32 %v520, %v557
    %v560 = vmul.f32 %v261, %v542
    %v561 = vmul.f32 %v261, %v543
    %v562 = vadd.f32 %v523, %v560
    %v563 = vadd.f32 %v524, %v561
    %v564 = vmul.f32 %v267, %v542
    %v565 = vmul.f32 %v267, %v543
    %v566 = vadd.f32 %v527, %v564
    %v567 = vadd.f32 %v528, %v565
    %v568 = vmul.f32 %v273, %v542
    %v569 = vmul.f32 %v273, %v543
    %v570 = vadd.f32 %v531, %v568
    %v571 = vadd.f32 %v532, %v569
    %v572 = vmul.f32 %v279, %v542
    %v573 = vmul.f32 %v279, %v543
    %v574 = vadd.f32 %v535, %v572
    %v575 = vadd.f32 %v536, %v573
    %v576 = vmul.f32 %v285, %v542
    %v577 = vmul.f32 %v285, %v543
    %v578 = vadd.f32 %v539, %v576
    %v579 = vadd.f32 %v540, %v577
    %v582 = vrot.slane %v546, 7
    %v583 = vrot.slane %v547, 7
    %v584 = vsel %vm294, %v582, %v583
    %v586 = vsel %vm294, 0.0, %v582
    %588 = vrot.lane.b32.xlu0 %v586, 1
    %v589 = vpop.permute.xlu0 %588
    %590 = vrot.lane.b32.xlu0 %v584, 1
    %v591 = vpop.permute.xlu0 %590
    %v594 = vsel %vm307, 0.0, %v589
    %v595 = vsel %vm307, 0.0, %v591
    %v596 = vadd.f32 %v291, %v594
    %v597 = vadd.f32 %v291, %v595
    %v600 = vrot.slane %v550, 7
    %v601 = vrot.slane %v551, 7
    %v602 = vsel %vm294, %v600, %v601
    %v605 = vsel %vm294, 0.0, %v600
    %v606 = vadd.f32 %v596, %v605
    %v607 = vadd.f32 %v597, %v602
    %v610 = vrot.slane %v554, 7
    %v611 = vrot.slane %v555, 7
    %v612 = vsel %vm294, %v610, %v611
    %v614 = vsel %vm294, 0.0, %v610
    %616 = vrot.lane.b32.xlu0 %v614, 127
    %v617 = vpop.permute.xlu0 %616
    %618 = vrot.lane.b32.xlu0 %v612, 127
    %v619 = vpop.permute.xlu0 %618
    %v622 = vsel %vm336, %v617, 0.0
    %v623 = vsel %vm336, %v619, 0.0
    %v624 = vadd.f32 %v606, %v622
    %v625 = vadd.f32 %v607, %v623
    %628 = vrot.lane.b32.xlu0 %v558, 1
    %v629 = vpop.permute.xlu0 %628
    %630 = vrot.lane.b32.xlu0 %v559, 1
    %v631 = vpop.permute.xlu0 %630
    %v634 = vsel %vm307, 0.0, %v629
    %v635 = vsel %vm307, 0.0, %v631
    %v636 = vadd.f32 %v624, %v634
    %v637 = vadd.f32 %v625, %v635
    %v638 = vadd.f32 %v636, %v562
    %v639 = vadd.f32 %v637, %v563
    %642 = vrot.lane.b32.xlu0 %v566, 127
    %v643 = vpop.permute.xlu0 %642
    %644 = vrot.lane.b32.xlu0 %v567, 127
    %v645 = vpop.permute.xlu0 %644
    %v648 = vsel %vm336, %v643, 0.0
    %v649 = vsel %vm336, %v645, 0.0
    %v650 = vadd.f32 %v638, %v648
    %v651 = vadd.f32 %v639, %v649
    %v654 = vrot.slane %v570, 1
    %v655 = vrot.slane %v571, 1
    %v656 = vsel %vm369, %v654, %v655
    %v658 = vsel %vm369, %v655, 0.0
    %660 = vrot.lane.b32.xlu0 %v656, 1
    %v661 = vpop.permute.xlu0 %660
    %662 = vrot.lane.b32.xlu0 %v658, 1
    %v663 = vpop.permute.xlu0 %662
    %v666 = vsel %vm307, 0.0, %v661
    %v667 = vsel %vm307, 0.0, %v663
    %v668 = vadd.f32 %v650, %v666
    %v669 = vadd.f32 %v651, %v667
    %v672 = vrot.slane %v574, 1
    %v673 = vrot.slane %v575, 1
    %v674 = vsel %vm369, %v672, %v673
    %v677 = vsel %vm369, %v673, 0.0
    %v678 = vadd.f32 %v668, %v674
    %v679 = vadd.f32 %v669, %v677
    %v682 = vrot.slane %v578, 1
    %v683 = vrot.slane %v579, 1
    %v684 = vsel %vm369, %v682, %v683
    %v686 = vsel %vm369, %v683, 0.0
    %688 = vrot.lane.b32.xlu0 %v684, 127
    %v689 = vpop.permute.xlu0 %688
    %690 = vrot.lane.b32.xlu0 %v686, 127
    %v691 = vpop.permute.xlu0 %690
    %v694 = vsel %vm336, %v689, 0.0
    %v695 = vsel %vm336, %v691, 0.0
    %v696 = vadd.f32 %v678, %v694
    %v697 = vadd.f32 %v679, %v695
    %v698 = vsub.f32 0.0, %v696
    %v699 = vsub.f32 0.0, %v697
    %v700 = vmul.f32 %v698, 1.442695
    %v701 = vpow.pop %v700
    %v702 = vmul.f32 %v699, 1.442695
    %v703 = vpow.pop %v702
    %v704 = vadd.f32 %v701, 1.0
    %v705 = vadd.f32 %v703, 1.0
    %v706 = vrcp.pop %v704
    %v707 = vrcp.pop %v705
    %s708 = scalar_lea.vmem [#allocation3], 128
    %v709 = vld [vmem:[%s708] sm:$0xff]
    %v710 = vld [vmem:[%s708 + $0x8] sm:$0xff]
    %v711 = vmul.f32 %v66, %v709
    %v712 = vmul.f32 %v66, %v710
    %v713 = vadd.f32 %v711, 0.0
    %v714 = vadd.f32 %v712, 0.0
    %v715 = vmul.f32 %v72, %v709
    %v716 = vmul.f32 %v72, %v710
    %v717 = vadd.f32 %v715, 0.0
    %v718 = vadd.f32 %v716, 0.0
    %v719 = vmul.f32 %v78, %v709
    %v720 = vmul.f32 %v78, %v710
    %v721 = vadd.f32 %v719, 0.0
    %v722 = vadd.f32 %v720, 0.0
    %v723 = vmul.f32 %v84, %v709
    %v724 = vmul.f32 %v84, %v710
    %v725 = vadd.f32 %v723, 0.0
    %v726 = vadd.f32 %v724, 0.0
    %v727 = vmul.f32 %v90, %v709
    %v728 = vmul.f32 %v90, %v710
    %v729 = vadd.f32 %v727, 0.0
    %v730 = vadd.f32 %v728, 0.0
    %v731 = vmul.f32 %v96, %v709
    %v732 = vmul.f32 %v96, %v710
    %v733 = vadd.f32 %v731, 0.0
    %v734 = vadd.f32 %v732, 0.0
    %v735 = vmul.f32 %v102, %v709
    %v736 = vmul.f32 %v102, %v710
    %v737 = vadd.f32 %v735, 0.0
    %v738 = vadd.f32 %v736, 0.0
    %v739 = vmul.f32 %v108, %v709
    %v740 = vmul.f32 %v108, %v710
    %v741 = vadd.f32 %v739, 0.0
    %v742 = vadd.f32 %v740, 0.0
    %v743 = vmul.f32 %v114, %v709
    %v744 = vmul.f32 %v114, %v710
    %v745 = vadd.f32 %v743, 0.0
    %v746 = vadd.f32 %v744, 0.0
    %s747 = scalar_lea.vmem [#allocation3], 144
    %v748 = vld [vmem:[%s747] sm:$0xff]
    %v749 = vld [vmem:[%s747 + $0x8] sm:$0xff]
    %v750 = vmul.f32 %v123, %v748
    %v751 = vmul.f32 %v123, %v749
    %v752 = vadd.f32 %v713, %v750
    %v753 = vadd.f32 %v714, %v751
    %v754 = vmul.f32 %v129, %v748
    %v755 = vmul.f32 %v129, %v749
    %v756 = vadd.f32 %v717, %v754
    %v757 = vadd.f32 %v718, %v755
    %v758 = vmul.f32 %v135, %v748
    %v759 = vmul.f32 %v135, %v749
    %v760 = vadd.f32 %v721, %v758
    %v761 = vadd.f32 %v722, %v759
    %v762 = vmul.f32 %v141, %v748
    %v763 = vmul.f32 %v141, %v749
    %v764 = vadd.f32 %v725, %v762
    %v765 = vadd.f32 %v726, %v763
    %v766 = vmul.f32 %v147, %v748
    %v767 = vmul.f32 %v147, %v749
    %v768 = vadd.f32 %v729, %v766
    %v769 = vadd.f32 %v730, %v767
    %v770 = vmul.f32 %v153, %v748
    %v771 = vmul.f32 %v153, %v749
    %v772 = vadd.f32 %v733, %v770
    %v773 = vadd.f32 %v734, %v771
    %v774 = vmul.f32 %v159, %v748
    %v775 = vmul.f32 %v159, %v749
    %v776 = vadd.f32 %v737, %v774
    %v777 = vadd.f32 %v738, %v775
    %v778 = vmul.f32 %v165, %v748
    %v779 = vmul.f32 %v165, %v749
    %v780 = vadd.f32 %v741, %v778
    %v781 = vadd.f32 %v742, %v779
    %v782 = vmul.f32 %v171, %v748
    %v783 = vmul.f32 %v171, %v749
    %v784 = vadd.f32 %v745, %v782
    %v785 = vadd.f32 %v746, %v783
    %s786 = scalar_lea.vmem [#allocation3], 160
    %v787 = vld [vmem:[%s786] sm:$0xff]
    %v788 = vld [vmem:[%s786 + $0x8] sm:$0xff]
    %v789 = vmul.f32 %v180, %v787
    %v790 = vmul.f32 %v180, %v788
    %v791 = vadd.f32 %v752, %v789
    %v792 = vadd.f32 %v753, %v790
    %v793 = vmul.f32 %v186, %v787
    %v794 = vmul.f32 %v186, %v788
    %v795 = vadd.f32 %v756, %v793
    %v796 = vadd.f32 %v757, %v794
    %v797 = vmul.f32 %v192, %v787
    %v798 = vmul.f32 %v192, %v788
    %v799 = vadd.f32 %v760, %v797
    %v800 = vadd.f32 %v761, %v798
    %v801 = vmul.f32 %v198, %v787
    %v802 = vmul.f32 %v198, %v788
    %v803 = vadd.f32 %v764, %v801
    %v804 = vadd.f32 %v765, %v802
    %v805 = vmul.f32 %v204, %v787
    %v806 = vmul.f32 %v204, %v788
    %v807 = vadd.f32 %v768, %v805
    %v808 = vadd.f32 %v769, %v806
    %v809 = vmul.f32 %v210, %v787
    %v810 = vmul.f32 %v210, %v788
    %v811 = vadd.f32 %v772, %v809
    %v812 = vadd.f32 %v773, %v810
    %v813 = vmul.f32 %v216, %v787
    %v814 = vmul.f32 %v216, %v788
    %v815 = vadd.f32 %v776, %v813
    %v816 = vadd.f32 %v777, %v814
    %v817 = vmul.f32 %v222, %v787
    %v818 = vmul.f32 %v222, %v788
    %v819 = vadd.f32 %v780, %v817
    %v820 = vadd.f32 %v781, %v818
    %v821 = vmul.f32 %v228, %v787
    %v822 = vmul.f32 %v228, %v788
    %v823 = vadd.f32 %v784, %v821
    %v824 = vadd.f32 %v785, %v822
    %s825 = scalar_lea.vmem [#allocation3], 176
    %v826 = vld [vmem:[%s825] sm:$0xff]
    %v827 = vld [vmem:[%s825 + $0x8] sm:$0xff]
    %v828 = vmul.f32 %v237, %v826
    %v829 = vmul.f32 %v237, %v827
    %v830 = vadd.f32 %v791, %v828
    %v831 = vadd.f32 %v792, %v829
    %v832 = vmul.f32 %v243, %v826
    %v833 = vmul.f32 %v243, %v827
    %v834 = vadd.f32 %v795, %v832
    %v835 = vadd.f32 %v796, %v833
    %v836 = vmul.f32 %v249, %v826
    %v837 = vmul.f32 %v249, %v827
    %v838 = vadd.f32 %v799, %v836
    %v839 = vadd.f32 %v800, %v837
    %v840 = vmul.f32 %v255, %v826
    %v841 = vmul.f32 %v255, %v827
    %v842 = vadd.f32 %v803, %v840
    %v843 = vadd.f32 %v804, %v841
    %v844 = vmul.f32 %v261, %v826
    %v845 = vmul.f32 %v261, %v827
    %v846 = vadd.f32 %v807, %v844
    %v847 = vadd.f32 %v808, %v845
    %v848 = vmul.f32 %v267, %v826
    %v849 = vmul.f32 %v267, %v827
    %v850 = vadd.f32 %v811, %v848
    %v851 = vadd.f32 %v812, %v849
    %v852 = vmul.f32 %v273, %v826
    %v853 = vmul.f32 %v273, %v827
    %v854 = vadd.f32 %v815, %v852
    %v855 = vadd.f32 %v816, %v853
    %v856 = vmul.f32 %v279, %v826
    %v857 = vmul.f32 %v279, %v827
    %v858 = vadd.f32 %v819, %v856
    %v859 = vadd.f32 %v820, %v857
    %v860 = vmul.f32 %v285, %v826
    %v861 = vmul.f32 %v285, %v827
    %v862 = vadd.f32 %v823, %v860
    %v863 = vadd.f32 %v824, %v861
    %v866 = vrot.slane %v830, 7
    %v867 = vrot.slane %v831, 7
    %v868 = vsel %vm294, %v866, %v867
    %v870 = vsel %vm294, 0.0, %v866
    %872 = vrot.lane.b32.xlu0 %v870, 1
    %v873 = vpop.permute.xlu0 %872
    %874 = vrot.lane.b32.xlu0 %v868, 1
    %v875 = vpop.permute.xlu0 %874
    %v878 = vsel %vm307, 0.0, %v873
    %v879 = vsel %vm307, 0.0, %v875
    %v880 = vadd.f32 %v291, %v878
    %v881 = vadd.f32 %v291, %v879
    %v884 = vrot.slane %v834, 7
    %v885 = vrot.slane %v835, 7
    %v886 = vsel %vm294, %v884, %v885
    %v889 = vsel %vm294, 0.0, %v884
    %v890 = vadd.f32 %v880, %v889
    %v891 = vadd.f32 %v881, %v886
    %v894 = vrot.slane %v838, 7
    %v895 = vrot.slane %v839, 7
    %v896 = vsel %vm294, %v894, %v895
    %v898 = vsel %vm294, 0.0, %v894
    %900 = vrot.lane.b32.xlu0 %v898, 127
    %v901 = vpop.permute.xlu0 %900
    %902 = vrot.lane.b32.xlu0 %v896, 127
    %v903 = vpop.permute.xlu0 %902
    %v906 = vsel %vm336, %v901, 0.0
    %v907 = vsel %vm336, %v903, 0.0
    %v908 = vadd.f32 %v890, %v906
    %v909 = vadd.f32 %v891, %v907
    %912 = vrot.lane.b32.xlu0 %v842, 1
    %v913 = vpop.permute.xlu0 %912
    %914 = vrot.lane.b32.xlu0 %v843, 1
    %v915 = vpop.permute.xlu0 %914
    %v918 = vsel %vm307, 0.0, %v913
    %v919 = vsel %vm307, 0.0, %v915
    %v920 = vadd.f32 %v908, %v918
    %v921 = vadd.f32 %v909, %v919
    %v922 = vadd.f32 %v920, %v846
    %v923 = vadd.f32 %v921, %v847
    %926 = vrot.lane.b32.xlu0 %v850, 127
    %v927 = vpop.permute.xlu0 %926
    %928 = vrot.lane.b32.xlu0 %v851, 127
    %v929 = vpop.permute.xlu0 %928
    %v932 = vsel %vm336, %v927, 0.0
    %v933 = vsel %vm336, %v929, 0.0
    %v934 = vadd.f32 %v922, %v932
    %v935 = vadd.f32 %v923, %v933
    %v938 = vrot.slane %v854, 1
    %v939 = vrot.slane %v855, 1
    %v940 = vsel %vm369, %v938, %v939
    %v942 = vsel %vm369, %v939, 0.0
    %944 = vrot.lane.b32.xlu0 %v940, 1
    %v945 = vpop.permute.xlu0 %944
    %946 = vrot.lane.b32.xlu0 %v942, 1
    %v947 = vpop.permute.xlu0 %946
    %v950 = vsel %vm307, 0.0, %v945
    %v951 = vsel %vm307, 0.0, %v947
    %v952 = vadd.f32 %v934, %v950
    %v953 = vadd.f32 %v935, %v951
    %v956 = vrot.slane %v858, 1
    %v957 = vrot.slane %v859, 1
    %v958 = vsel %vm369, %v956, %v957
    %v961 = vsel %vm369, %v957, 0.0
    %v962 = vadd.f32 %v952, %v958
    %v963 = vadd.f32 %v953, %v961
    %v966 = vrot.slane %v862, 1
    %v967 = vrot.slane %v863, 1
    %v968 = vsel %vm369, %v966, %v967
    %v970 = vsel %vm369, %v967, 0.0
    %972 = vrot.lane.b32.xlu0 %v968, 127
    %v973 = vpop.permute.xlu0 %972
    %974 = vrot.lane.b32.xlu0 %v970, 127
    %v975 = vpop.permute.xlu0 %974
    %v978 = vsel %vm336, %v973, 0.0
    %v979 = vsel %vm336, %v975, 0.0
    %v980 = vadd.f32 %v962, %v978
    %v981 = vadd.f32 %v963, %v979
    %v982 = vsub.f32 0.0, %v980
    %v983 = vsub.f32 0.0, %v981
    %v984 = vmul.f32 %v982, 1.442695
    %v985 = vpow.pop %v984
    %v986 = vmul.f32 %v983, 1.442695
    %v987 = vpow.pop %v986
    %v988 = vadd.f32 %v985, 1.0
    %v989 = vadd.f32 %v987, 1.0
    %v990 = vrcp.pop %v988
    %v991 = vrcp.pop %v989
    %s992 = scalar_lea.vmem [#allocation3], 192
    %v993 = vld [vmem:[%s992] sm:$0xff]
    %v994 = vld [vmem:[%s992 + $0x8] sm:$0xff]
    %v995 = vmul.f32 %v66, %v993
    %v996 = vmul.f32 %v66, %v994
    %v997 = vadd.f32 %v995, 0.0
    %v998 = vadd.f32 %v996, 0.0
    %v999 = vmul.f32 %v72, %v993
    %v1000 = vmul.f32 %v72, %v994
    %v1001 = vadd.f32 %v999, 0.0
    %v1002 = vadd.f32 %v1000, 0.0
    %v1003 = vmul.f32 %v78, %v993
    %v1004 = vmul.f32 %v78, %v994
    %v1005 = vadd.f32 %v1003, 0.0
    %v1006 = vadd.f32 %v1004, 0.0
    %v1007 = vmul.f32 %v84, %v993
    %v1008 = vmul.f32 %v84, %v994
    %v1009 = vadd.f32 %v1007, 0.0
    %v1010 = vadd.f32 %v1008, 0.0
    %v1011 = vmul.f32 %v90, %v993
    %v1012 = vmul.f32 %v90, %v994
    %v1013 = vadd.f32 %v1011, 0.0
    %v1014 = vadd.f32 %v1012, 0.0
    %v1015 = vmul.f32 %v96, %v993
    %v1016 = vmul.f32 %v96, %v994
    %v1017 = vadd.f32 %v1015, 0.0
    %v1018 = vadd.f32 %v1016, 0.0
    %v1019 = vmul.f32 %v102, %v993
    %v1020 = vmul.f32 %v102, %v994
    %v1021 = vadd.f32 %v1019, 0.0
    %v1022 = vadd.f32 %v1020, 0.0
    %v1023 = vmul.f32 %v108, %v993
    %v1024 = vmul.f32 %v108, %v994
    %v1025 = vadd.f32 %v1023, 0.0
    %v1026 = vadd.f32 %v1024, 0.0
    %v1027 = vmul.f32 %v114, %v993
    %v1028 = vmul.f32 %v114, %v994
    %v1029 = vadd.f32 %v1027, 0.0
    %v1030 = vadd.f32 %v1028, 0.0
    %s1031 = scalar_lea.vmem [#allocation3], 208
    %v1032 = vld [vmem:[%s1031] sm:$0xff]
    %v1033 = vld [vmem:[%s1031 + $0x8] sm:$0xff]
    %v1034 = vmul.f32 %v123, %v1032
    %v1035 = vmul.f32 %v123, %v1033
    %v1036 = vadd.f32 %v997, %v1034
    %v1037 = vadd.f32 %v998, %v1035
    %v1038 = vmul.f32 %v129, %v1032
    %v1039 = vmul.f32 %v129, %v1033
    %v1040 = vadd.f32 %v1001, %v1038
    %v1041 = vadd.f32 %v1002, %v1039
    %v1042 = vmul.f32 %v135, %v1032
    %v1043 = vmul.f32 %v135, %v1033
    %v1044 = vadd.f32 %v1005, %v1042
    %v1045 = vadd.f32 %v1006, %v1043
    %v1046 = vmul.f32 %v141, %v1032
    %v1047 = vmul.f32 %v141, %v1033
    %v1048 = vadd.f32 %v1009, %v1046
    %v1049 = vadd.f32 %v1010, %v1047
    %v1050 = vmul.f32 %v147, %v1032
    %v1051 = vmul.f32 %v147, %v1033
    %v1052 = vadd.f32 %v1013, %v1050
    %v1053 = vadd.f32 %v1014, %v1051
    %v1054 = vmul.f32 %v153, %v1032
    %v1055 = vmul.f32 %v153, %v1033
    %v1056 = vadd.f32 %v1017, %v1054
    %v1057 = vadd.f32 %v1018, %v1055
    %v1058 = vmul.f32 %v159, %v1032
    %v1059 = vmul.f32 %v159, %v1033
    %v1060 = vadd.f32 %v1021, %v1058
    %v1061 = vadd.f32 %v1022, %v1059
    %v1062 = vmul.f32 %v165, %v1032
    %v1063 = vmul.f32 %v165, %v1033
    %v1064 = vadd.f32 %v1025, %v1062
    %v1065 = vadd.f32 %v1026, %v1063
    %v1066 = vmul.f32 %v171, %v1032
    %v1067 = vmul.f32 %v171, %v1033
    %v1068 = vadd.f32 %v1029, %v1066
    %v1069 = vadd.f32 %v1030, %v1067
    %s1070 = scalar_lea.vmem [#allocation3], 224
    %v1071 = vld [vmem:[%s1070] sm:$0xff]
    %v1072 = vld [vmem:[%s1070 + $0x8] sm:$0xff]
    %v1073 = vmul.f32 %v180, %v1071
    %v1074 = vmul.f32 %v180, %v1072
    %v1075 = vadd.f32 %v1036, %v1073
    %v1076 = vadd.f32 %v1037, %v1074
    %v1077 = vmul.f32 %v186, %v1071
    %v1078 = vmul.f32 %v186, %v1072
    %v1079 = vadd.f32 %v1040, %v1077
    %v1080 = vadd.f32 %v1041, %v1078
    %v1081 = vmul.f32 %v192, %v1071
    %v1082 = vmul.f32 %v192, %v1072
    %v1083 = vadd.f32 %v1044, %v1081
    %v1084 = vadd.f32 %v1045, %v1082
    %v1085 = vmul.f32 %v198, %v1071
    %v1086 = vmul.f32 %v198, %v1072
    %v1087 = vadd.f32 %v1048, %v1085
    %v1088 = vadd.f32 %v1049, %v1086
    %v1089 = vmul.f32 %v204, %v1071
    %v1090 = vmul.f32 %v204, %v1072
    %v1091 = vadd.f32 %v1052, %v1089
    %v1092 = vadd.f32 %v1053, %v1090
    %v1093 = vmul.f32 %v210, %v1071
    %v1094 = vmul.f32 %v210, %v1072
    %v1095 = vadd.f32 %v1056, %v1093
    %v1096 = vadd.f32 %v1057, %v1094
    %v1097 = vmul.f32 %v216, %v1071
    %v1098 = vmul.f32 %v216, %v1072
    %v1099 = vadd.f32 %v1060, %v1097
    %v1100 = vadd.f32 %v1061, %v1098
    %v1101 = vmul.f32 %v222, %v1071
    %v1102 = vmul.f32 %v222, %v1072
    %v1103 = vadd.f32 %v1064, %v1101
    %v1104 = vadd.f32 %v1065, %v1102
    %v1105 = vmul.f32 %v228, %v1071
    %v1106 = vmul.f32 %v228, %v1072
    %v1107 = vadd.f32 %v1068, %v1105
    %v1108 = vadd.f32 %v1069, %v1106
    %s1109 = scalar_lea.vmem [#allocation3], 240
    %v1110 = vld [vmem:[%s1109] sm:$0xff]
    %v1111 = vld [vmem:[%s1109 + $0x8] sm:$0xff]
    %v1112 = vmul.f32 %v237, %v1110
    %v1113 = vmul.f32 %v237, %v1111
    %v1114 = vadd.f32 %v1075, %v1112
    %v1115 = vadd.f32 %v1076, %v1113
    %v1116 = vmul.f32 %v243, %v1110
    %v1117 = vmul.f32 %v243, %v1111
    %v1118 = vadd.f32 %v1079, %v1116
    %v1119 = vadd.f32 %v1080, %v1117
    %v1120 = vmul.f32 %v249, %v1110
    %v1121 = vmul.f32 %v249, %v1111
    %v1122 = vadd.f32 %v1083, %v1120
    %v1123 = vadd.f32 %v1084, %v1121
    %v1124 = vmul.f32 %v255, %v1110
    %v1125 = vmul.f32 %v255, %v1111
    %v1126 = vadd.f32 %v1087, %v1124
    %v1127 = vadd.f32 %v1088, %v1125
    %v1128 = vmul.f32 %v261, %v1110
    %v1129 = vmul.f32 %v261, %v1111
    %v1130 = vadd.f32 %v1091, %v1128
    %v1131 = vadd.f32 %v1092, %v1129
    %v1132 = vmul.f32 %v267, %v1110
    %v1133 = vmul.f32 %v267, %v1111
    %v1134 = vadd.f32 %v1095, %v1132
    %v1135 = vadd.f32 %v1096, %v1133
    %v1136 = vmul.f32 %v273, %v1110
    %v1137 = vmul.f32 %v273, %v1111
    %v1138 = vadd.f32 %v1099, %v1136
    %v1139 = vadd.f32 %v1100, %v1137
    %v1140 = vmul.f32 %v279, %v1110
    %v1141 = vmul.f32 %v279, %v1111
    %v1142 = vadd.f32 %v1103, %v1140
    %v1143 = vadd.f32 %v1104, %v1141
    %v1144 = vmul.f32 %v285, %v1110
    %v1145 = vmul.f32 %v285, %v1111
    %v1146 = vadd.f32 %v1107, %v1144
    %v1147 = vadd.f32 %v1108, %v1145
    %v1150 = vrot.slane %v1114, 7
    %v1151 = vrot.slane %v1115, 7
    %v1152 = vsel %vm294, %v1150, %v1151
    %v1154 = vsel %vm294, 0.0, %v1150
    %1156 = vrot.lane.b32.xlu0 %v1154, 1
    %v1157 = vpop.permute.xlu0 %1156
    %1158 = vrot.lane.b32.xlu0 %v1152, 1
    %v1159 = vpop.permute.xlu0 %1158
    %v1162 = vsel %vm307, 0.0, %v1157
    %v1163 = vsel %vm307, 0.0, %v1159
    %v1164 = vadd.f32 %v291, %v1162
    %v1165 = vadd.f32 %v291, %v1163
    %v1168 = vrot.slane %v1118, 7
    %v1169 = vrot.slane %v1119, 7
    %v1170 = vsel %vm294, %v1168, %v1169
    %v1173 = vsel %vm294, 0.0, %v1168
    %v1174 = vadd.f32 %v1164, %v1173
    %v1175 = vadd.f32 %v1165, %v1170
    %v1178 = vrot.slane %v1122, 7
    %v1179 = vrot.slane %v1123, 7
    %v1180 = vsel %vm294, %v1178, %v1179
    %v1182 = vsel %vm294, 0.0, %v1178
    %1184 = vrot.lane.b32.xlu0 %v1182, 127
    %v1185 = vpop.permute.xlu0 %1184
    %1186 = vrot.lane.b32.xlu0 %v1180, 127
    %v1187 = vpop.permute.xlu0 %1186
    %v1190 = vsel %vm336, %v1185, 0.0
    %v1191 = vsel %vm336, %v1187, 0.0
    %v1192 = vadd.f32 %v1174, %v1190
    %v1193 = vadd.f32 %v1175, %v1191
    %1196 = vrot.lane.b32.xlu0 %v1126, 1
    %v1197 = vpop.permute.xlu0 %1196
    %1198 = vrot.lane.b32.xlu0 %v1127, 1
    %v1199 = vpop.permute.xlu0 %1198
    %v1202 = vsel %vm307, 0.0, %v1197
    %v1203 = vsel %vm307, 0.0, %v1199
    %v1204 = vadd.f32 %v1192, %v1202
    %v1205 = vadd.f32 %v1193, %v1203
    %v1206 = vadd.f32 %v1204, %v1130
    %v1207 = vadd.f32 %v1205, %v1131
    %1210 = vrot.lane.b32.xlu0 %v1134, 127
    %v1211 = vpop.permute.xlu0 %1210
    %1212 = vrot.lane.b32.xlu0 %v1135, 127
    %v1213 = vpop.permute.xlu0 %1212
    %v1216 = vsel %vm336, %v1211, 0.0
    %v1217 = vsel %vm336, %v1213, 0.0
    %v1218 = vadd.f32 %v1206, %v1216
    %v1219 = vadd.f32 %v1207, %v1217
    %v1222 = vrot.slane %v1138, 1
    %v1223 = vrot.slane %v1139, 1
    %v1224 = vsel %vm369, %v1222, %v1223
    %v1226 = vsel %vm369, %v1223, 0.0
    %1228 = vrot.lane.b32.xlu0 %v1224, 1
    %v1229 = vpop.permute.xlu0 %1228
    %1230 = vrot.lane.b32.xlu0 %v1226, 1
    %v1231 = vpop.permute.xlu0 %1230
    %v1234 = vsel %vm307, 0.0, %v1229
    %v1235 = vsel %vm307, 0.0, %v1231
    %v1236 = vadd.f32 %v1218, %v1234
    %v1237 = vadd.f32 %v1219, %v1235
    %v1240 = vrot.slane %v1142, 1
    %v1241 = vrot.slane %v1143, 1
    %v1242 = vsel %vm369, %v1240, %v1241
    %v1245 = vsel %vm369, %v1241, 0.0
    %v1246 = vadd.f32 %v1236, %v1242
    %v1247 = vadd.f32 %v1237, %v1245
    %v1250 = vrot.slane %v1146, 1
    %v1251 = vrot.slane %v1147, 1
    %v1252 = vsel %vm369, %v1250, %v1251
    %v1254 = vsel %vm369, %v1251, 0.0
    %1256 = vrot.lane.b32.xlu0 %v1252, 127
    %v1257 = vpop.permute.xlu0 %1256
    %1258 = vrot.lane.b32.xlu0 %v1254, 127
    %v1259 = vpop.permute.xlu0 %1258
    %v1262 = vsel %vm336, %v1257, 0.0
    %v1263 = vsel %vm336, %v1259, 0.0
    %v1264 = vadd.f32 %v1246, %v1262
    %v1265 = vadd.f32 %v1247, %v1263
    %v1266 = vsub.f32 0.0, %v1264
    %v1267 = vsub.f32 0.0, %v1265
    %v1268 = vmul.f32 %v1266, 1.442695
    %v1269 = vpow.pop %v1268
    %v1270 = vmul.f32 %v1267, 1.442695
    %v1271 = vpow.pop %v1270
    %v1272 = vadd.f32 %v1269, 1.0
    %v1273 = vadd.f32 %v1271, 1.0
    %v1274 = vrcp.pop %v1272
    %v1275 = vrcp.pop %v1273
    %1278 = vrot.lane.b32.xlu0 %v706, 16
    %v1279 = vpop.permute.xlu0 %1278
    %1280 = vrot.lane.b32.xlu0 %v707, 16
    %v1281 = vpop.permute.xlu0 %1280
    %1286 = vrot.lane.b32.xlu0 %v990, 32
    %v1287 = vpop.permute.xlu0 %1286
    %1288 = vrot.lane.b32.xlu0 %v991, 32
    %v1289 = vpop.permute.xlu0 %1288
    %1294 = vrot.lane.b32.xlu0 %v1274, 48
    %v1295 = vpop.permute.xlu0 %1294
    %1296 = vrot.lane.b32.xlu0 %v1275, 48
    %v1297 = vpop.permute.xlu0 %1296
    %vm1300 = vcmask 130048
    %v1301 = vsel %vm1300, %v422, %v1279
    %v1302 = vsel %vm1300, %v423, %v1281
    %vm1303 = vcmask 261120
    %v1304 = vsel %vm1303, %v1301, %v1287
    %v1305 = vsel %vm1303, %v1302, %v1289
    %vm1306 = vcmask 392192
    %v1307 = vsel %vm1306, %v1304, %v1295
    %v1308 = vsel %vm1306, %v1305, %v1297
    %v1309 = vld [vmem:[%s3] sm:$0xff]
    %v1310 = vld [vmem:[%s3 + $0x8] sm:$0xff]
    %v1311 = vld [vmem:[%s3 + $0x10] sm:$0xff]
    %v1312 = vld [vmem:[%s3 + $0x18] sm:$0xff]
    %v1314 = vsel %vm1300, %v1309, 0
    %v1317 = vsel %vm1300, %v1310, 0
    %v1320 = vsel %vm1300, %v1311, 0
    %v1323 = vsel %vm1300, %v1312, 0
    %1325 = vmatprep.subr.mxu0 0.0
    %1326 = vmatpush1.msra.mxu0 0.0
    %1327 = vmatprep.subr.mxu0 0.0
    %1328 = vmatpush1.msra.mxu0 0.0
    %1329 = vmatprep.subr.mxu0 0.0
    %1330 = vmatpush1.msra.mxu0 0.0
    %1331 = vmatprep.subr.mxu0 0.0
    %1332 = vmatpush1.msra.mxu0 0.0
    %1333 = vmatprep.subr.mxu0 0.0
    %1334 = vmatpush1.msra.mxu0 0.0
    %1335 = vmatprep.subr.mxu0 0.0
    %1336 = vmatpush1.msra.mxu0 0.0
    %1337 = vmatprep.subr.mxu0 0.0
    %1338 = vmatpush1.msra.mxu0 0.0
    %1339 = vmatprep.subr.mxu0 0.0
    %1340 = vmatpush1.msra.mxu0 0.0
    %1341 = vmatprep.subr.mxu0 0.0
    %1342 = vmatpush1.msra.mxu0 0.0
    %1343 = vmatprep.subr.mxu0 0.0
    %1344 = vmatpush1.msra.mxu0 0.0
    %1345 = vmatprep.subr.mxu0 0.0
    %1346 = vmatpush1.msra.mxu0 0.0
    %1347 = vmatprep.subr.mxu0 0.0
    %1348 = vmatpush1.msra.mxu0 0.0
    %1349 = vmatprep.subr.mxu0 0.0
    %1350 = vmatpush1.msra.mxu0 0.0
    %1351 = vmatprep.subr.mxu0 0.0
    %1352 = vmatpush1.msra.mxu0 0.0
    %1353 = vmatprep.subr.mxu0 0.0
    %1354 = vmatpush1.msra.mxu0 %v1308
    %1355 = vmatprep.subr.mxu0 0.0
    %1356 = vmatpush1.msra.mxu0 %v1307
    %1357 = vmatprep.subr.mxu0 0.0
    %1358 = vmatpush2.msra.mxu0 0.0
    %1359 = vmatprep.subr.mxu0 0.0
    %1360 = vmatpush2.msra.mxu0 0.0
    %1361 = vmatprep.subr.mxu0 0.0
    %1362 = vmatpush2.msra.mxu0 0.0
    %1363 = vmatprep.subr.mxu0 0.0
    %1364 = vmatpush2.msra.mxu0 0.0
    %1365 = vmatprep.subr.mxu0 0.0
    %1366 = vmatpush2.msra.mxu0 0.0
    %1367 = vmatprep.subr.mxu0 0.0
    %1368 = vmatpush2.msra.mxu0 0.0
    %1369 = vmatprep.subr.mxu0 0.0
    %1370 = vmatpush2.msra.mxu0 0.0
    %1371 = vmatprep.subr.mxu0 0.0
    %1372 = vmatpush2.msra.mxu0 0.0
    %1373 = vmatprep.subr.mxu0 0.0
    %1374 = vmatpush2.msra.mxu0 0.0
    %1375 = vmatprep.subr.mxu0 0.0
    %1376 = vmatpush2.msra.mxu0 0.0
    %1377 = vmatprep.subr.mxu0 0.0
    %1378 = vmatpush2.msra.mxu0 0.0
    %1379 = vmatprep.subr.mxu0 0.0
    %1380 = vmatpush2.msra.mxu0 0.0
    %1381 = vmatprep.subr.mxu0 0.0
    %1382 = vmatpush2.msra.mxu0 0.0
    %1383 = vmatprep.subr.mxu0 0.0
    %1384 = vmatpush2.msra.mxu0 0.0
    %1385 = vmatprep.subr.mxu0 0.0
    %1386 = vmatpush2.msra.mxu0 0.0
    %1387 = vmatprep.subr.mxu0 0.0
    %1388 = vmatpush2.msra.mxu0 0.0
    %1389 = vmatprep.mubr.f32.mxu0 0.0
    %1390 = vmatmul.mubr.f32.gmra.mxu0 %v1314
    %v1391 = vpop.f32.mrf.mxu0
    %v1392 = vadd.f32 0.0, %v1391
    %v1393 = vpop.f32.mrf.mxu0
    %1394 = vmatprep.mubr.f32.mxu0 0.0
    %1395 = vmatmul.mubr.f32.gmra.mxu0 %v1317
    %v1396 = vpop.f32.mrf.mxu0
    %v1397 = vadd.f32 0.0, %v1396
    %v1398 = vpop.f32.mrf.mxu0
    %1399 = vmatprep.mubr.f32.mxu0 0.0
    %1400 = vmatmul.mubr.f32.gmra.mxu0 %v1320
    %v1401 = vpop.f32.mrf.mxu0
    %v1402 = vadd.f32 0.0, %v1401
    %v1403 = vpop.f32.mrf.mxu0
    %1404 = vmatprep.mubr.f32.mxu0 0.0
    %1405 = vmatmul.mubr.f32.gmra.mxu0 %v1323
    %v1406 = vpop.f32.mrf.mxu0
    %v1407 = vadd.f32 0.0, %v1406
    %v1408 = vpop.f32.mrf.mxu0
    %1409 = vdwg.mxu0
    %v1410 = vld [vmem:[#allocation8] sm:$0xff]
    %v1411 = vld [vmem:[#allocation8 + $0x8] sm:$0xff]
    %v1412 = vld [vmem:[#allocation8 + $0x10] sm:$0xff]
    %v1413 = vld [vmem:[#allocation8 + $0x18] sm:$0xff]
    %v1414 = vld [vmem:[#allocation8 + $0x20] sm:$0xff]
    %v1415 = vld [vmem:[#allocation8 + $0x28] sm:$0xff]
    %v1416 = vld [vmem:[#allocation8 + $0x30] sm:$0xff]
    %v1417 = vld [vmem:[#allocation8 + $0x38] sm:$0xff]
    %vm1418 = vcmask 523264
    %v1420 = vsel %vm1418, %v1392, 0
    %v1423 = vsel %vm1418, %v1397, 0
    %v1426 = vsel %vm1418, %v1402, 0
    %v1429 = vsel %vm1418, %v1407, 0
    %1431 = vmatprep.subr.mxu0 0.0
    %1432 = vmatpush1.msra.mxu0 0.0
    %1433 = vmatprep.subr.mxu0 0.0
    %1434 = vmatpush1.msra.mxu0 0.0
    %1435 = vmatprep.subr.mxu0 0.0
    %1436 = vmatpush1.msra.mxu0 0.0
    %1437 = vmatprep.subr.mxu0 0.0
    %1438 = vmatpush1.msra.mxu0 0.0
    %1439 = vmatprep.subr.mxu0 0.0
    %1440 = vmatpush1.msra.mxu0 0.0
    %1441 = vmatprep.subr.mxu0 0.0
    %1442 = vmatpush1.msra.mxu0 0.0
    %1443 = vmatprep.subr.mxu0 0.0
    %1444 = vmatpush1.msra.mxu0 0.0
    %1445 = vmatprep.subr.mxu0 0.0
    %1446 = vmatpush1.msra.mxu0 0.0
    %1447 = vmatprep.subr.mxu0 0.0
    %1448 = vmatpush1.msra.mxu0 %v1417
    %1449 = vmatprep.subr.mxu0 0.0
    %1450 = vmatpush1.msra.mxu0 %v1416
    %1451 = vmatprep.subr.mxu0 0.0
    %1452 = vmatpush1.msra.mxu0 %v1415
    %1453 = vmatprep.subr.mxu0 0.0
    %1454 = vmatpush1.msra.mxu0 %v1414
    %1455 = vmatprep.subr.mxu0 0.0
    %1456 = vmatpush1.msra.mxu0 %v1413
    %1457 = vmatprep.subr.mxu0 0.0
    %1458 = vmatpush1.msra.mxu0 %v1412
    %1459 = vmatprep.subr.mxu0 0.0
    %1460 = vmatpush1.msra.mxu0 %v1411
    %1461 = vmatprep.subr.mxu0 0.0
    %1462 = vmatpush1.msra.mxu0 %v1410
    %1463 = vmatprep.subr.mxu0 0.0
    %1464 = vmatpush2.msra.mxu0 0.0
    %1465 = vmatprep.subr.mxu0 0.0
    %1466 = vmatpush2.msra.mxu0 0.0
    %1467 = vmatprep.subr.mxu0 0.0
    %1468 = vmatpush2.msra.mxu0 0.0
    %1469 = vmatprep.subr.mxu0 0.0
    %1470 = vmatpush2.msra.mxu0 0.0
    %1471 = vmatprep.subr.mxu0 0.0
    %1472 = vmatpush2.msra.mxu0 0.0
    %1473 = vmatprep.subr.mxu0 0.0
    %1474 = vmatpush2.msra.mxu0 0.0
    %1475 = vmatprep.subr.mxu0 0.0
    %1476 = vmatpush2.msra.mxu0 0.0
    %1477 = vmatprep.subr.mxu0 0.0
    %1478 = vmatpush2.msra.mxu0 0.0
    %1479 = vmatprep.subr.mxu0 0.0
    %1480 = vmatpush2.msra.mxu0 0.0
    %1481 = vmatprep.subr.mxu0 0.0
    %1482 = vmatpush2.msra.mxu0 0.0
    %1483 = vmatprep.subr.mxu0 0.0
    %1484 = vmatpush2.msra.mxu0 0.0
    %1485 = vmatprep.subr.mxu0 0.0
    %1486 = vmatpush2.msra.mxu0 0.0
    %1487 = vmatprep.subr.mxu0 0.0
    %1488 = vmatpush2.msra.mxu0 0.0
    %1489 = vmatprep.subr.mxu0 0.0
    %1490 = vmatpush2.msra.mxu0 0.0
    %1491 = vmatprep.subr.mxu0 0.0
    %1492 = vmatpush2.msra.mxu0 0.0
    %1493 = vmatprep.subr.mxu0 0.0
    %1494 = vmatpush2.msra.mxu0 0.0
    %1495 = vmatprep.mubr.f32.mxu0 0.0
    %1496 = vmatmul.mubr.f32.gmra.mxu0 %v1420
    %v1497 = vpop.f32.mrf.mxu0
    %v1498 = vadd.f32 0.0, %v1497
    %v1499 = vpop.f32.mrf.mxu0
    %1500 = vmatprep.mubr.f32.mxu0 0.0
    %1501 = vmatmul.mubr.f32.gmra.mxu0 %v1423
    %v1502 = vpop.f32.mrf.mxu0
    %v1503 = vadd.f32 0.0, %v1502
    %v1504 = vpop.f32.mrf.mxu0
    %1505 = vmatprep.mubr.f32.mxu0 0.0
    %1506 = vmatmul.mubr.f32.gmra.mxu0 %v1426
    %v1507 = vpop.f32.mrf.mxu0
    %v1508 = vadd.f32 0.0, %v1507
    %v1509 = vpop.f32.mrf.mxu0
    %1510 = vmatprep.mubr.f32.mxu0 0.0
    %1511 = vmatmul.mubr.f32.gmra.mxu0 %v1429
    %v1512 = vpop.f32.mrf.mxu0
    %v1513 = vadd.f32 0.0, %v1512
    %v1514 = vpop.f32.mrf.mxu0
    %1515 = vdwg.mxu0
    %1516 = vst [vmem:[#allocation10] sm:$0xff] %v1498
    %1517 = vst [vmem:[#allocation10 + $0x8] sm:$0xff] %v1503
    %1518 = vst [vmem:[#allocation10 + $0x10] sm:$0xff] %v1508
    %1519 = vst [vmem:[#allocation10 + $0x18] sm:$0xff] %v1513
    // Predicated region
    $region34: #{tpu_custom_call.1} parent=1 // pred_check
      _
    $region35: #{tpu_custom_call.1} parent=1 // pred_check_branch
      %1521 = sbr.rel (0) target = $region37
    $region36: #{tpu_custom_call.1} parent=1 // pred_region
      %s1523 = ssub.s32 512, 512
      %1524 = vsyncadd [#allocation5], %s1523
      %s1525 = sshll.u32 [#allocation10], 4
      %s1526 = int_to_ptr.vmem [resolvable:$true] %s1525
      %1531 = dma.vmem_to_hbm [thread:$0]  %s1526, 512, %s5, [#allocation5], 128, 128, 8
    $region37: #{tpu_custom_call.1} parent=1 // pred_fallthru
      _
    // Predicated region
    $region38: #{tpu_custom_call.1} parent=1 // pred_check
      _
    $region39: #{tpu_custom_call.1} parent=1 // pred_check_branch
      %1533 = sbr.rel (0) target = $region41
    $region40: #{tpu_custom_call.1} parent=1 // pred_region
      %1534 = dma.done [#allocation5], 512
    $region41: #{tpu_custom_call.1} parent=1 // pred_fallthru
      _
    %1535 = vsyncpa [#allocation4], 1
    %1536 = vsyncpa [#allocation9], 1
    %1537 = vsyncpa [#allocation5], 1
    %1538 = vsyncpa [#allocation6], 1

</llo_original>
